<compile_context>
chip_gen: v7x
topology: tpu7x:2x2x1
jax: 0.10.0
libtpu: 0.0.40
codegen_flags: <defaults>
</compile_context>

<pallas_src>
import jax
import jax.numpy as jnp
from jax.experimental import pallas as pl
from jax.experimental.pallas import tpu as pltpu

NUM_GROUPS = 16
EPS = 1e-5


def convblock_gn_kernel(x_ref, w_ref, par_ref, gmat_t_ref, o_ref):
    # x_ref     : (NB, H, W, Cin)        unpadded NHWC block (NB images per grid step)
    # w_ref     : (Cout, 3*(3*Cin+1))    per-dy blocks [w(dx=0..2, cin), bias-or-zero column]
    # par_ref   : (Cout, 2+G) f32        [:,0]=gamma, [:,1]=beta, [:,2:]=one-hot channel->group
    # gmat_t_ref: (G, Cout) f32          transposed one-hot (precomputed; no in-kernel transpose)
    # o_ref     : (NB, Cout, H*W)        channel-major output (lane-dense: H*W in lanes)
    NB, H, W, Cin = x_ref.shape
    Cout = o_ref.shape[1]
    G = gmat_t_ref.shape[0]
    K1 = 3 * Cin + 1  # per-dy contraction width (3 dx taps x Cin, plus the bias/ones lane)

    gamma_c = par_ref[:, 0:1]
    beta_c = par_ref[:, 1:2]
    gmat = par_ref[:, 2:2 + G]          # (Cout, G)
    gmat_t = gmat_t_ref[...]            # (G, Cout)
    inv_count = 1.0 / float((Cout // G) * H * W)
    ones_lane = jnp.ones((H + 2, W, 1), dtype=x_ref.dtype)   # hoisted out of the image loop

    for nb in range(NB):  # static unroll over the images packed into this grid step
        x = x_ref[nb]  # (H, W, Cin)

        # ---- reflection pad (1) fused in-kernel: padded row/col 0 mirrors index 1, etc. ----
        xr = jnp.concatenate([x[1:2], x, x[H - 2:H - 1]], axis=0)            # (H+2, W, Cin)
        xp = jnp.concatenate([xr[:, 1:2], xr, xr[:, W - 2:W - 1]], axis=1)   # (H+2, W+2, Cin)

        # ---- dx (width) shifts folded into the lane dim; +ones lane carries the conv bias ----
        # lane index = dx*Cin + c for dx in {0,1,2}; lane 3*Cin is the ones/bias lane.
        xw = jnp.concatenate(
            [xp[:, 0:W, :], xp[:, 1:W + 1, :], xp[:, 2:W + 2, :], ones_lane],
            axis=-1)                                                         # (H+2, W, 3*Cin+1)

        # ---- conv(+bias) as 3 accumulated NT matmuls; dy is a free base-row offset ----
        acc = None
        for dy in range(3):
            rhs = xw[dy:dy + H].reshape(H * W, K1)
            part = jax.lax.dot_general(
                w_ref[:, dy * K1:(dy + 1) * K1], rhs, (((1,), (1,)), ((), ())),
                preferred_element_type=jnp.float32)                          # (Cout, H*W) f32
            acc = part if acc is None else acc + part

        # ---- ELU (alpha = 1); on v5e this exp pass (1-wide EUP) is the likely binding slot ----
        acc = jnp.where(acc > 0, acc, jnp.exp(jnp.minimum(acc, 0.0)) - 1.0)

        # ---- GroupNorm: fused sum/sumsq -> group stats -> single scale/shift FMA ----
        sum_c = jnp.sum(acc, axis=1, keepdims=True)                          # (Cout, 1)
        sq_c = jnp.sum(acc * acc, axis=1, keepdims=True)                     # (Cout, 1)
        moments_c = jnp.concatenate([sum_c, sq_c], axis=1)                   # (Cout, 2)
        moments_g = jnp.dot(gmat_t, moments_c, preferred_element_type=jnp.float32)  # (G, 2)
        mean_g = moments_g[:, 0:1] * inv_count
        # E[x^2]-E[x]^2 in f32: fine for post-ELU activations (mean and spread both O(1));
        # clamp to >=0 to guard against rounding before rsqrt.
        var_g = jnp.maximum(moments_g[:, 1:2] * inv_count - mean_g * mean_g, 0.0)
        inv_g = jax.lax.rsqrt(var_g + EPS)
        stats_g = jnp.concatenate([mean_g, inv_g], axis=1)                   # (G, 2)
        stats_c = jnp.dot(gmat, stats_g, preferred_element_type=jnp.float32)  # (Cout, 2)
        scale_c = stats_c[:, 1:2] * gamma_c            # inv_std * gamma, per channel
        shift_c = beta_c - stats_c[:, 0:1] * scale_c   # beta - mean * scale
        o_ref[nb] = (acc * scale_c + shift_c).astype(o_ref.dtype)


def _vmem_limit_bytes():
    # ~75% of the generation's physical VMEM: ~96 MiB on v5e/v6e (128 MiB), ~48 MiB on v7x (64 MiB).
    try:
        return int(pltpu.get_tpu_info().vmem_capacity_bytes * 3 // 4)
    except Exception:
        return 48 * 1024 * 1024  # safe fallback on every generation


def _pick_images_per_step(n, per_image_bytes, budget_bytes, max_nb=8):
    # Largest divisor of n that fits the VMEM budget while keeping >=2 grid steps
    # (so both v7x TensorCores get work via the "parallel" batch axis).
    best = 1
    for d in range(1, min(n, max_nb) + 1):
        if n % d != 0:
            continue
        if d * per_image_bytes > budget_bytes:
            break
        if n // d >= 2 or n == 1:
            best = d
    return best


def convblock_gn(x_nchw, w_oihw, bias, gamma, beta, *,
                 matmul_dtype=jnp.bfloat16, out_dtype=jnp.float32):
    # TODO(synk): grouped convolution (Conv3x3 groups > 1) is not implemented; ConvBlockGN's
    #             default groups=1 is assumed.
    N, Cin, H, W = x_nchw.shape
    Cout = w_oihw.shape[0]
    G = NUM_GROUPS
    assert Cout % G == 0, "GroupNorm(16) requires out_channels % 16 == 0"
    assert H >= 2 and W >= 2, "ReflectionPad2d(1) needs H,W >= 2"

    # NCHW -> NHWC + cast in one copy (padding is now done inside the kernel).
    # TODO(synk): consume NCHW directly to remove this remaining HBM round trip.
    x_nhwc = jnp.transpose(x_nchw, (0, 2, 3, 1)).astype(matmul_dtype)        # (N, H, W, Cin)

    # Weights: OIHW -> per-dy blocks of (dx, cin) with the bias folded into dy=0's extra column.
    K1 = 3 * Cin + 1
    w_k = jnp.transpose(w_oihw, (0, 2, 3, 1)).reshape(Cout, 3, 3 * Cin)      # (Cout, dy, dx*Cin+c)
    blocks = []
    for dy in range(3):
        extra = bias.reshape(Cout, 1) if dy == 0 else jnp.zeros((Cout, 1), w_oihw.dtype)
        blocks.append(jnp.concatenate([w_k[:, dy, :], extra], axis=1))
    w_aug = jnp.concatenate(blocks, axis=1).astype(matmul_dtype)             # (Cout, 3*K1)

    gmat = (jnp.arange(Cout)[:, None] // (Cout // G)
            == jnp.arange(G)[None, :]).astype(jnp.float32)                   # (Cout, G)
    par = jnp.concatenate(
        [gamma.reshape(Cout, 1).astype(jnp.float32),
         beta.reshape(Cout, 1).astype(jnp.float32),
         gmat], axis=1)                                                      # (Cout, 2+G)
    gmat_t = gmat.T                                                          # (G, Cout)

    vmem_limit = _vmem_limit_bytes()
    bpe_in = jnp.dtype(matmul_dtype).itemsize
    bpe_out = jnp.dtype(out_dtype).itemsize
    per_image = ((H * W * Cin + (H + 2) * (W + 2) * Cin + (H + 2) * W * K1) * bpe_in
                 + Cout * H * W * (4 + bpe_out))
    nb = _pick_images_per_step(N, per_image, vmem_limit // 4)

    out = pl.pallas_call(
        convblock_gn_kernel,
        out_shape=jax.ShapeDtypeStruct((N, Cout, H * W), out_dtype),         # NCHW-flat
        grid_spec=pltpu.PrefetchScalarGridSpec(
            num_scalar_prefetch=0,
            grid=(N // nb,),
            in_specs=[
                pl.BlockSpec((nb, H, W, Cin), lambda n: (n, 0, 0, 0)),
                pl.BlockSpec((Cout, 3 * K1), lambda n: (0, 0)),
                pl.BlockSpec((Cout, 2 + G), lambda n: (0, 0)),
                pl.BlockSpec((G, Cout), lambda n: (0, 0)),
            ],
            out_specs=pl.BlockSpec((nb, Cout, H * W), lambda n: (n, 0, 0)),
        ),
        compiler_params=pltpu.CompilerParams(
            dimension_semantics=("parallel",),    # batch axis shards across TCs (v7x megacore)
            vmem_limit_bytes=vmem_limit,
        ),
    )(x_nhwc, w_aug, par, gmat_t)

    return out.reshape(N, Cout, H, W)             # free reshape: already NCHW-ordered


def ref_forward(x, w, b, gamma, beta):
    """Pure-JAX reference matching the PyTorch forward (NCHW)."""
    xp = jnp.pad(x, ((0, 0), (0, 0), (1, 1), (1, 1)), mode="reflect")
    y = jax.lax.conv_general_dilated(
        xp, w, window_strides=(1, 1), padding="VALID",
        dimension_numbers=("NCHW", "OIHW", "NCHW")) + b[None, :, None, None]
    y = jnp.where(y > 0, y, jnp.exp(jnp.minimum(y, 0.0)) - 1.0)   # ELU
    N, C, H, W = y.shape
    yg = y.reshape(N, NUM_GROUPS, C // NUM_GROUPS, H, W)
    mean = yg.mean(axis=(2, 3, 4), keepdims=True)
    var = yg.var(axis=(2, 3, 4), keepdims=True)
    yn = ((yg - mean) / jnp.sqrt(var + EPS)).reshape(N, C, H, W)
    return yn * gamma[None, :, None, None] + beta[None, :, None, None]


if __name__ == "__main__":
    # Small shapes consistent with the module: out_channels must be divisible by 16 (GroupNorm).
    N, Cin, H, W = 2, 4, 16, 16
    Cout = 32

    key = jax.random.PRNGKey(0)
    kx, kw, kb, kg, kbt = jax.random.split(key, 5)
    x = jax.random.normal(kx, (N, Cin, H, W), dtype=jnp.float32)
    w = jax.random.normal(kw, (Cout, Cin, 3, 3), dtype=jnp.float32) * 0.1
    b = jax.random.normal(kb, (Cout,), dtype=jnp.float32) * 0.1
    gamma = 1.0 + 0.1 * jax.random.normal(kg, (Cout,), dtype=jnp.float32)
    beta = 0.1 * jax.random.normal(kbt, (Cout,), dtype=jnp.float32)

    ref = jax.block_until_ready(ref_forward(x, w, b, gamma, beta))

    # f32 matmul path: tight parity with the PyTorch module.
    out_f32 = jax.block_until_ready(
        convblock_gn(x, w, b, gamma, beta, matmul_dtype=jnp.float32))
    assert out_f32.shape == (N, Cout, H, W)
    err_f32 = float(jnp.max(jnp.abs(out_f32 - ref)))
    assert err_f32 < 1e-4, f"f32 max abs error {err_f32}"

    # Default bf16 matmul path (f32 accumulation): expected small quantization drift only.
    out_bf16 = jax.block_until_ready(convblock_gn(x, w, b, gamma, beta))
    err_bf16 = float(jnp.max(jnp.abs(out_bf16 - ref)))
    assert err_bf16 < 1e-1, f"bf16 max abs error {err_bf16}"

    print("KERNEL_OK")
</pallas_src>

<mosaic_0001>
module attributes {stable_mosaic.version = 11 : i64} {
  func.func @convblock_gn_kernel(%arg0: i32, %arg1: memref<1x16x16x4xf32, #tpu.memory_space<vmem>>, %arg2: memref<32x39xf32, #tpu.memory_space<vmem>>, %arg3: memref<32x18xf32, #tpu.memory_space<vmem>>, %arg4: memref<16x32xf32, #tpu.memory_space<vmem>>, %arg5: memref<1x32x256xf32, #tpu.memory_space<vmem>>) attributes {dimension_semantics = [#tpu.dimension_semantics<parallel>], iteration_bounds = array<i64: 2>, scalar_prefetch = 0 : i64, scratch_operands = 0 : i64, tpu.core_type = #tpu.core_type<tc>, window_params = [{transform_indices = @transform_0, window_bounds = array<i64: 1, 16, 16, 4>}, {pipeline_mode = #tpu.pipeline_mode<synchronous>, transform_indices = @transform_1, window_bounds = array<i64: 32, 39>}, {pipeline_mode = #tpu.pipeline_mode<synchronous>, transform_indices = @transform_2, window_bounds = array<i64: 32, 18>}, {pipeline_mode = #tpu.pipeline_mode<synchronous>, transform_indices = @transform_3, window_bounds = array<i64: 16, 32>}, {transform_indices = @transform_4, window_bounds = array<i64: 1, 32, 256>}]} {
    %c0 = arith.constant 0 : index
    %c0_0 = arith.constant 0 : index
    %0 = vector.load %arg3[%c0, %c0_0] : memref<32x18xf32, #tpu.memory_space<vmem>>, vector<32x1xf32>
    %c0_1 = arith.constant 0 : index
    %c1 = arith.constant 1 : index
    %1 = vector.load %arg3[%c0_1, %c1] : memref<32x18xf32, #tpu.memory_space<vmem>>, vector<32x1xf32>
    %c0_2 = arith.constant 0 : index
    %c2 = arith.constant 2 : index
    %2 = vector.load %arg3[%c0_2, %c2] : memref<32x18xf32, #tpu.memory_space<vmem>>, vector<32x16xf32>
    %c0_3 = arith.constant 0 : index
    %c0_4 = arith.constant 0 : index
    %3 = vector.load %arg4[%c0_3, %c0_4] : memref<16x32xf32, #tpu.memory_space<vmem>>, vector<16x32xf32>
    %cst = arith.constant 1.000000e+00 : f32
    %4 = vector.broadcast %cst : f32 to vector<18x16x1xf32>
    %c0_5 = arith.constant 0 : index
    %c0_6 = arith.constant 0 : index
    %c0_7 = arith.constant 0 : index
    %c0_8 = arith.constant 0 : index
    %5 = vector.load %arg1[%c0_5, %c0_6, %c0_7, %c0_8] : memref<1x16x16x4xf32, #tpu.memory_space<vmem>>, vector<1x16x16x4xf32>
    %6 = vector.shape_cast %5 : vector<1x16x16x4xf32> to vector<16x16x4xf32>
    %7 = vector.extract_strided_slice %6 {offsets = [1, 0, 0], sizes = [1, 16, 4], strides = [1, 1, 1]} : vector<16x16x4xf32> to vector<1x16x4xf32>
    %8 = vector.extract_strided_slice %6 {offsets = [14, 0, 0], sizes = [1, 16, 4], strides = [1, 1, 1]} : vector<16x16x4xf32> to vector<1x16x4xf32>
    %9 = tpu.concatenate %7, %6, %8 in 0 : vector<1x16x4xf32>, vector<16x16x4xf32>, vector<1x16x4xf32> -> vector<18x16x4xf32>
    %10 = vector.extract_strided_slice %9 {offsets = [0, 1, 0], sizes = [18, 1, 4], strides = [1, 1, 1]} : vector<18x16x4xf32> to vector<18x1x4xf32>
    %11 = vector.extract_strided_slice %9 {offsets = [0, 14, 0], sizes = [18, 1, 4], strides = [1, 1, 1]} : vector<18x16x4xf32> to vector<18x1x4xf32>
    %12 = tpu.concatenate %10, %9, %11 in 1 : vector<18x1x4xf32>, vector<18x16x4xf32>, vector<18x1x4xf32> -> vector<18x18x4xf32>
    %13 = vector.extract_strided_slice %12 {offsets = [0, 0, 0], sizes = [18, 16, 4], strides = [1, 1, 1]} : vector<18x18x4xf32> to vector<18x16x4xf32>
    %14 = vector.extract_strided_slice %12 {offsets = [0, 1, 0], sizes = [18, 16, 4], strides = [1, 1, 1]} : vector<18x18x4xf32> to vector<18x16x4xf32>
    %15 = vector.extract_strided_slice %12 {offsets = [0, 2, 0], sizes = [18, 16, 4], strides = [1, 1, 1]} : vector<18x18x4xf32> to vector<18x16x4xf32>
    %16 = tpu.concatenate %13, %14, %15, %4 in 2 : vector<18x16x4xf32>, vector<18x16x4xf32>, vector<18x16x4xf32>, vector<18x16x1xf32> -> vector<18x16x13xf32>
    %17 = vector.extract_strided_slice %16 {offsets = [0, 0, 0], sizes = [16, 16, 13], strides = [1, 1, 1]} : vector<18x16x13xf32> to vector<16x16x13xf32>
    %18 = vector.shape_cast %17 : vector<16x16x13xf32> to vector<256x13xf32>
    %c0_9 = arith.constant 0 : index
    %c0_10 = arith.constant 0 : index
    %19 = vector.load %arg2[%c0_9, %c0_10] : memref<32x39xf32, #tpu.memory_space<vmem>>, vector<32x13xf32>
    %cst_11 = arith.constant dense<0.000000e+00> : vector<32x256xf32>
    %20 = tpu.matmul %19, %18, %cst_11 {dimension_numbers = #tpu.dot_dimension_numbers<[1], [1], [0], [0], [0, 0, 1, 0], [], []>} : vector<32x13xf32>, vector<256x13xf32>, vector<32x256xf32> -> vector<32x256xf32>
    %21 = vector.extract_strided_slice %16 {offsets = [1, 0, 0], sizes = [16, 16, 13], strides = [1, 1, 1]} : vector<18x16x13xf32> to vector<16x16x13xf32>
    %22 = vector.shape_cast %21 : vector<16x16x13xf32> to vector<256x13xf32>
    %c0_12 = arith.constant 0 : index
    %c13 = arith.constant 13 : index
    %23 = vector.load %arg2[%c0_12, %c13] : memref<32x39xf32, #tpu.memory_space<vmem>>, vector<32x13xf32>
    %cst_13 = arith.constant dense<0.000000e+00> : vector<32x256xf32>
    %24 = tpu.matmul %23, %22, %cst_13 {dimension_numbers = #tpu.dot_dimension_numbers<[1], [1], [0], [0], [0, 0, 1, 0], [], []>} : vector<32x13xf32>, vector<256x13xf32>, vector<32x256xf32> -> vector<32x256xf32>
    %25 = arith.addf %20, %24 : vector<32x256xf32>
    %26 = vector.extract_strided_slice %16 {offsets = [2, 0, 0], sizes = [16, 16, 13], strides = [1, 1, 1]} : vector<18x16x13xf32> to vector<16x16x13xf32>
    %27 = vector.shape_cast %26 : vector<16x16x13xf32> to vector<256x13xf32>
    %c0_14 = arith.constant 0 : index
    %c26 = arith.constant 26 : index
    %28 = vector.load %arg2[%c0_14, %c26] : memref<32x39xf32, #tpu.memory_space<vmem>>, vector<32x13xf32>
    %cst_15 = arith.constant dense<0.000000e+00> : vector<32x256xf32>
    %29 = tpu.matmul %28, %27, %cst_15 {dimension_numbers = #tpu.dot_dimension_numbers<[1], [1], [0], [0], [0, 0, 1, 0], [], []>} : vector<32x13xf32>, vector<256x13xf32>, vector<32x256xf32> -> vector<32x256xf32>
    %30 = arith.addf %25, %29 : vector<32x256xf32>
    %cst_16 = arith.constant 0.000000e+00 : f32
    %31 = vector.broadcast %cst_16 : f32 to vector<32x256xf32>
    %32 = arith.cmpf ogt, %30, %31 : vector<32x256xf32>
    %cst_17 = arith.constant 0.000000e+00 : f32
    %33 = vector.broadcast %cst_17 : f32 to vector<32x256xf32>
    %34 = arith.minimumf %30, %33 : vector<32x256xf32>
    %35 = math.exp %34 : vector<32x256xf32>
    %cst_18 = arith.constant 1.000000e+00 : f32
    %36 = vector.broadcast %cst_18 : f32 to vector<32x256xf32>
    %37 = arith.subf %35, %36 : vector<32x256xf32>
    %38 = arith.select %32, %30, %37 : vector<32x256xi1>, vector<32x256xf32>
    %cst_19 = arith.constant dense<0.000000e+00> : vector<32xf32>
    %39 = vector.multi_reduction <add>, %38, %cst_19 [1] : vector<32x256xf32> to vector<32xf32>
    %40 = vector.shape_cast %39 : vector<32xf32> to vector<32x1xf32>
    %41 = arith.mulf %38, %38 : vector<32x256xf32>
    %cst_20 = arith.constant dense<0.000000e+00> : vector<32xf32>
    %42 = vector.multi_reduction <add>, %41, %cst_20 [1] : vector<32x256xf32> to vector<32xf32>
    %43 = vector.shape_cast %42 : vector<32xf32> to vector<32x1xf32>
    %44 = tpu.concatenate %40, %43 in 1 : vector<32x1xf32>, vector<32x1xf32> -> vector<32x2xf32>
    %cst_21 = arith.constant dense<0.000000e+00> : vector<16x2xf32>
    %45 = tpu.matmul %3, %44, %cst_21 {dimension_numbers = #tpu.dot_dimension_numbers<[1], [0], [0], [1], [0, 0, 1, 1], [], []>} : vector<16x32xf32>, vector<32x2xf32>, vector<16x2xf32> -> vector<16x2xf32>
    %46 = vector.extract_strided_slice %45 {offsets = [0, 0], sizes = [16, 1], strides = [1, 1]} : vector<16x2xf32> to vector<16x1xf32>
    %cst_22 = arith.constant 0.001953125 : f32
    %47 = vector.broadcast %cst_22 : f32 to vector<16x1xf32>
    %48 = arith.mulf %46, %47 : vector<16x1xf32>
    %49 = vector.extract_strided_slice %45 {offsets = [0, 1], sizes = [16, 1], strides = [1, 1]} : vector<16x2xf32> to vector<16x1xf32>
    %cst_23 = arith.constant 0.001953125 : f32
    %50 = vector.broadcast %cst_23 : f32 to vector<16x1xf32>
    %51 = arith.mulf %49, %50 : vector<16x1xf32>
    %52 = arith.mulf %48, %48 : vector<16x1xf32>
    %53 = arith.subf %51, %52 : vector<16x1xf32>
    %cst_24 = arith.constant 0.000000e+00 : f32
    %54 = vector.broadcast %cst_24 : f32 to vector<16x1xf32>
    %55 = arith.maximumf %53, %54 : vector<16x1xf32>
    %cst_25 = arith.constant 9.99999974E-6 : f32
    %56 = vector.broadcast %cst_25 : f32 to vector<16x1xf32>
    %57 = arith.addf %55, %56 : vector<16x1xf32>
    %58 = math.rsqrt %57 : vector<16x1xf32>
    %59 = tpu.concatenate %48, %58 in 1 : vector<16x1xf32>, vector<16x1xf32> -> vector<16x2xf32>
    %cst_26 = arith.constant dense<0.000000e+00> : vector<32x2xf32>
    %60 = tpu.matmul %2, %59, %cst_26 {dimension_numbers = #tpu.dot_dimension_numbers<[1], [0], [0], [1], [0, 0, 1, 1], [], []>} : vector<32x16xf32>, vector<16x2xf32>, vector<32x2xf32> -> vector<32x2xf32>
    %61 = vector.extract_strided_slice %60 {offsets = [0, 1], sizes = [32, 1], strides = [1, 1]} : vector<32x2xf32> to vector<32x1xf32>
    %62 = arith.mulf %61, %0 : vector<32x1xf32>
    %63 = vector.extract_strided_slice %60 {offsets = [0, 0], sizes = [32, 1], strides = [1, 1]} : vector<32x2xf32> to vector<32x1xf32>
    %64 = arith.mulf %63, %62 : vector<32x1xf32>
    %65 = arith.subf %1, %64 : vector<32x1xf32>
    %66 = vector.broadcast %62 : vector<32x1xf32> to vector<32x256xf32>
    %67 = arith.mulf %38, %66 : vector<32x256xf32>
    %68 = vector.broadcast %65 : vector<32x1xf32> to vector<32x256xf32>
    %69 = arith.addf %67, %68 : vector<32x256xf32>
    %c0_27 = arith.constant 0 : index
    %c0_28 = arith.constant 0 : index
    %c0_29 = arith.constant 0 : index
    %70 = vector.load %arg5[%c0_27, %c0_28, %c0_29] : memref<1x32x256xf32, #tpu.memory_space<vmem>>, vector<1x32x256xf32>
    %71 = vector.shape_cast %70 : vector<1x32x256xf32> to vector<32x256xf32>
    %72 = vector.shape_cast %69 : vector<32x256xf32> to vector<1x32x256xf32>
    tpu.vector_store %arg5[%c0_27, %c0_28, %c0_29], %72 {strides = array<i32>} : memref<1x32x256xf32, #tpu.memory_space<vmem>>, vector<1x32x256xf32>,
    return
  }
  func.func @transform_0(%arg0: i32) -> (i32, i32, i32, i32) {
    %c0_i32 = arith.constant 0 : i32
    %c0_i32_0 = arith.constant 0 : i32
    %c0_i32_1 = arith.constant 0 : i32
    %c0_i32_2 = arith.constant 0 : i32
    return %arg0, %c0_i32, %c0_i32_0, %c0_i32_1 : i32, i32, i32, i32
  }
  func.func @transform_1(%arg0: i32) -> (i32, i32) {
    %c0_i32 = arith.constant 0 : i32
    %c0_i32_0 = arith.constant 0 : i32
    %c0_i32_1 = arith.constant 0 : i32
    return %c0_i32, %c0_i32_0 : i32, i32
  }
  func.func @transform_2(%arg0: i32) -> (i32, i32) {
    %c0_i32 = arith.constant 0 : i32
    %c0_i32_0 = arith.constant 0 : i32
    %c0_i32_1 = arith.constant 0 : i32
    return %c0_i32, %c0_i32_0 : i32, i32
  }
  func.func @transform_3(%arg0: i32) -> (i32, i32) {
    %c0_i32 = arith.constant 0 : i32
    %c0_i32_0 = arith.constant 0 : i32
    %c0_i32_1 = arith.constant 0 : i32
    return %c0_i32, %c0_i32_0 : i32, i32
  }
  func.func @transform_4(%arg0: i32) -> (i32, i32, i32) {
    %c0_i32 = arith.constant 0 : i32
    %c0_i32_0 = arith.constant 0 : i32
    %c0_i32_1 = arith.constant 0 : i32
    return %arg0, %c0_i32, %c0_i32_0 : i32, i32, i32
  }
}

</mosaic_0001>

<llo_original>
// kernel: tpu_custom_call.1
$region0: #{tpu_custom_call.1}
  #allocation0 [shape = 'u32[]', space=smem, size = 0x4, offset = 0x4, fixed_abs, tag = 'smem constant byte address 0x4 - core index']
  #allocation1 [shape = 'u32[144,128]{1,0:T(1,128)}', space=vmem, size = 0x12000, scoped, tag = 'internal scratch']
  %s0 = inlined_call_operand.vmem [shape: f32[2,16,16,4], index: 0, kind: input, shape index: {}]
  %s1 = inlined_call_operand.vmem [shape: f32[32,39], index: 1, kind: input, shape index: {}]
  %s2 = inlined_call_operand.vmem [shape: f32[32,18], index: 2, kind: input, shape index: {}]
  %s3 = inlined_call_operand.vmem [shape: f32[16,32], index: 3, kind: input, shape index: {}]
  %s4 = inlined_call_operand.hbm [shape: f32[2,32,256], index: 4, kind: output, shape index: {}]
  %s5 = sld [smem:[#allocation0]]
  $region49: #{tpu_custom_call.1} parent=0
    _
  %s7 = ssub.s32 1, %s5
  %s8 = scalar_select 0, %s7, %s5
  $region1: #{tpu_custom_call.1} parent=0
    #allocation2 [shape = 'u8[65536]{0}', space=vmem, size = 0x10000, scoped, tag = 'output window, operand 0']
    #allocation3 [shape = 's32[2]{0}', space=sflag, size = 0x8, scoped, tag = 'scoped memory for tpu_custom_call.1']
    %9 = vsyncpa [#allocation3], 0
    %s10 = scalar_lea.sflag [#allocation3], 1
    %11 = vsyncpa %s10, 0
    loop: start=0, step=1, limit=4
    $region2: #{tpu_custom_call.1} parent=1 // loop_pre_header
      _
    $region3: #{tpu_custom_call.1} parent=1 // loop_header
      %s13 = sphi 0, %s17
      %p14 = scmp.ge.s32.totalorder %s13, 4
      %s23 = sphi 0, %s25
      %s26 = sphi 0, %s23
      %s27 = sphi 0, %s26
      %s43 = sphi 0, %s27
      %s47 = sphi 0, %s47
      %s49 = sphi 0, %s47
      %s50 = sphi 0, %s49
      %s64 = sphi 0, %s50
      %s68 = sphi 0, %s68
      %s70 = sphi 0, %s68
      %s71 = sphi 0, %s70
      %s85 = sphi 0, %s71
      %s89 = sphi 0, %s89
      %s91 = sphi 0, %s89
      %s92 = sphi 0, %s91
      %s106 = sphi 0, %s92
      %s112 = sphi 0, %s114
      %s115 = sphi 0, %s112
      %s116 = sphi 0, %s115
      %s132 = sphi 0, %s116
    $region4: #{tpu_custom_call.1} parent=1 // loop_header_branch
      %16 = sbr.rel (%p14) target = $region8
    $region5: #{tpu_custom_call.1} parent=1 // loop_body
      %s18 = ssub.s32 %s13, 1
      %s19 = ssub.s32 %s13, 2
      %s20 = sadd.s32 %s13, 1
      %s21 = ssub.s32 %s13, %s20
      %p22 = scmp.eq.s32.totalorder %s21, 0
      %s24 = sadd.s32 %s23, 1
      %s25 = scalar_select %p22, %s23, %s24
      %p28 = pneg %p22
      %p29 = scmp.eq.s32.totalorder %s13, 1
      %p30 = por %p28, %p29
      %p31 = scmp.ne.s32.totalorder %s23, %s26
      %p32 = scmp.eq.s32.totalorder %s13, 0
      %p33 = por %p31, %p32
      %p34 = scmp.ne.s32.totalorder %s23, %s26
      %p35 = scmp.eq.s32.totalorder %s18, 1
      %p36 = por %p34, %p35
      %p37 = scmp.ne.s32.totalorder %s26, %s27
      %p38 = scmp.eq.s32.totalorder %s18, 0
      %p39 = por %p37, %p38
      %p40 = scmp.ne.s32.totalorder %s26, %s27
      %p41 = scmp.eq.s32.totalorder %s19, 1
      %p42 = por %p40, %p41
      %p44 = scmp.ne.s32.totalorder %s27, %s43
      %p45 = scmp.eq.s32.totalorder %s19, 0
      %p46 = por %p44, %p45
      %s48 = sadd.s32 %s47, 1
      %p51 = scmp.eq.s32.totalorder %s13, 1
      %p52 = scmp.ne.s32.totalorder %s47, %s49
      %p53 = scmp.eq.s32.totalorder %s13, 0
      %p54 = por %p52, %p53
      %p55 = scmp.ne.s32.totalorder %s47, %s49
      %p56 = scmp.eq.s32.totalorder %s18, 1
      %p57 = por %p55, %p56
      %p58 = scmp.ne.s32.totalorder %s49, %s50
      %p59 = scmp.eq.s32.totalorder %s18, 0
      %p60 = por %p58, %p59
      %p61 = scmp.ne.s32.totalorder %s49, %s50
      %p62 = scmp.eq.s32.totalorder %s19, 1
      %p63 = por %p61, %p62
      %p65 = scmp.ne.s32.totalorder %s50, %s64
      %p66 = scmp.eq.s32.totalorder %s19, 0
      %p67 = por %p65, %p66
      %s69 = sadd.s32 %s68, 1
      %p72 = scmp.eq.s32.totalorder %s13, 1
      %p73 = scmp.ne.s32.totalorder %s68, %s70
      %p74 = scmp.eq.s32.totalorder %s13, 0
      %p75 = por %p73, %p74
      %p76 = scmp.ne.s32.totalorder %s68, %s70
      %p77 = scmp.eq.s32.totalorder %s18, 1
      %p78 = por %p76, %p77
      %p79 = scmp.ne.s32.totalorder %s70, %s71
      %p80 = scmp.eq.s32.totalorder %s18, 0
      %p81 = por %p79, %p80
      %p82 = scmp.ne.s32.totalorder %s70, %s71
      %p83 = scmp.eq.s32.totalorder %s19, 1
      %p84 = por %p82, %p83
      %p86 = scmp.ne.s32.totalorder %s71, %s85
      %p87 = scmp.eq.s32.totalorder %s19, 0
      %p88 = por %p86, %p87
      %s90 = sadd.s32 %s89, 1
      %p93 = scmp.eq.s32.totalorder %s13, 1
      %p94 = scmp.ne.s32.totalorder %s89, %s91
      %p95 = scmp.eq.s32.totalorder %s13, 0
      %p96 = por %p94, %p95
      %p97 = scmp.ne.s32.totalorder %s89, %s91
      %p98 = scmp.eq.s32.totalorder %s18, 1
      %p99 = por %p97, %p98
      %p100 = scmp.ne.s32.totalorder %s91, %s92
      %p101 = scmp.eq.s32.totalorder %s18, 0
      %p102 = por %p100, %p101
      %p103 = scmp.ne.s32.totalorder %s91, %s92
      %p104 = scmp.eq.s32.totalorder %s19, 1
      %p105 = por %p103, %p104
      %p107 = scmp.ne.s32.totalorder %s92, %s106
      %p108 = scmp.eq.s32.totalorder %s19, 0
      %p109 = por %p107, %p108
      %s110 = ssub.s32 %s13, %s20
      %p111 = scmp.eq.s32.totalorder %s110, 0
      %s113 = sadd.s32 %s112, 1
      %s114 = scalar_select %p111, %s112, %s113
      %p117 = pneg %p111
      %p118 = scmp.eq.s32.totalorder %s13, 1
      %p119 = por %p117, %p118
      %p120 = scmp.ne.s32.totalorder %s112, %s115
      %p121 = scmp.eq.s32.totalorder %s13, 0
      %p122 = por %p120, %p121
      %p123 = scmp.ne.s32.totalorder %s112, %s115
      %p124 = scmp.eq.s32.totalorder %s18, 1
      %p125 = por %p123, %p124
      %p126 = scmp.ne.s32.totalorder %s115, %s116
      %p127 = scmp.eq.s32.totalorder %s18, 0
      %p128 = por %p126, %p127
      %p129 = scmp.ne.s32.totalorder %s115, %s116
      %p130 = scmp.eq.s32.totalorder %s19, 1
      %p131 = por %p129, %p130
      %p133 = scmp.ne.s32.totalorder %s116, %s132
      %p134 = scmp.eq.s32.totalorder %s19, 0
      %p135 = por %p133, %p134
      %p136 = scmp.le.s32.totalorder 1, %s13
      %p137 = scmp.lt.s32.totalorder %s13, 3
      %p138 = pnand %p136, %p137
      %p139 = pneg %p138
      // Predicated region
      $region9: #{tpu_custom_call.1} parent=5 // pred_check
        _
      $region10: #{tpu_custom_call.1} parent=5 // pred_check_branch
        %141 = sbr.rel (%p138) target = $region12
      $region11: #{tpu_custom_call.1} parent=5 // pred_region
        %s142 = ssub.s32 %s13, 1
        // Predicated region
        $region13: #{tpu_custom_call.1} parent=11 // pred_check
          %p143 = pneg %p60
        $region14: #{tpu_custom_call.1} parent=11 // pred_check_branch
          %145 = sbr.rel (%p143) target = $region16
        $region15: #{tpu_custom_call.1} parent=11 // pred_region
          _
        $region16: #{tpu_custom_call.1} parent=11 // pred_fallthru
          _
        // Predicated region
        $region17: #{tpu_custom_call.1} parent=11 // pred_check
          %p146 = pneg %p81
        $region18: #{tpu_custom_call.1} parent=11 // pred_check_branch
          %148 = sbr.rel (%p146) target = $region20
        $region19: #{tpu_custom_call.1} parent=11 // pred_region
          _
        $region20: #{tpu_custom_call.1} parent=11 // pred_fallthru
          _
        // Predicated region
        $region21: #{tpu_custom_call.1} parent=11 // pred_check
          %p149 = pneg %p102
        $region22: #{tpu_custom_call.1} parent=11 // pred_check_branch
          %151 = sbr.rel (%p149) target = $region24
        $region23: #{tpu_custom_call.1} parent=11 // pred_region
          _
        $region24: #{tpu_custom_call.1} parent=11 // pred_fallthru
          _
      $region12: #{tpu_custom_call.1} parent=5 // pred_fallthru
        _
      %p152 = scmp.lt.s32.totalorder %s13, 2
      // Predicated region
      $region25: #{tpu_custom_call.1} parent=5 // pred_check
        %p153 = pneg %p152
      $region26: #{tpu_custom_call.1} parent=5 // pred_check_branch
        %155 = sbr.rel (%p153) target = $region28
      $region27: #{tpu_custom_call.1} parent=5 // pred_region
        // Predicated region
        $region29: #{tpu_custom_call.1} parent=27 // pred_check
          %p156 = pneg %p33
        $region30: #{tpu_custom_call.1} parent=27 // pred_check_branch
          %158 = sbr.rel (%p156) target = $region32
        $region31: #{tpu_custom_call.1} parent=27 // pred_region
          %p159 = scmp.lt.s32.totalorder %s13, 1
          %s160 = scalar_select %p159, %s13, 1
          %s161 = smul.addr %s160, 32
          %s162 = smul.addr %s161, 8
          %s163 = scalar_lea.vmem %s0, %s162
        $region32: #{tpu_custom_call.1} parent=27 // pred_fallthru
          _
      $region28: #{tpu_custom_call.1} parent=5 // pred_fallthru
        _
      %p164 = scmp.le.s32.totalorder 1, %s13
      %p165 = scmp.lt.s32.totalorder %s13, 3
      %p166 = pnand %p164, %p165
      %p167 = pneg %p166
      // Predicated region
      $region33: #{tpu_custom_call.1} parent=5 // pred_check
        _
      $region34: #{tpu_custom_call.1} parent=5 // pred_check_branch
        %169 = sbr.rel (%p166) target = $region36
      $region35: #{tpu_custom_call.1} parent=5 // pred_region
        %s170 = ssub.s32 %s13, 1
        %p171 = scmp.lt.s32.totalorder %s18, 1
        %s172 = scalar_select %p171, %s18, 1
        %s173 = smul.addr %s172, 32
        %s174 = smul.addr %s173, 8
        %s175 = scalar_lea.vmem %s0, %s174
        %p176 = pneg %p39
        %p177 = pneg %p36
        %p178 = pneg %p60
        %p179 = pneg %p57
        %p180 = pneg %p81
        %p181 = pneg %p78
        %p182 = pneg %p102
        %p183 = pneg %p99
        %p184 = pneg %p128
        %p185 = pneg %p125
        %s186 = sand.u32 %s115, 1
        %s187 = scalar_lea.sflag [#allocation3], %s186
        %s188 = sand.u32 %s115, 1
        %s189 = smul.addr %s188, 64
        %s190 = scalar_lea.vmem [#allocation2], %s189
        %p191 = scmp.lt.s32.totalorder %s18, 1
        %s192 = scalar_select %p191, %s18, 1
        %s193 = smul.addr %s192, 32
        %s194 = smul.addr %s193, 8
        %s195 = scalar_lea.vmem %s0, %s194
        %v196 = vld [vmem:[%s2] sm:$0xff]
        %v197 = vld [vmem:[%s2 + $0x8] sm:$0xff]
        %v198 = vld [vmem:[%s2 + $0x10] sm:$0xff]
        %v199 = vld [vmem:[%s2 + $0x18] sm:$0xff]
        %v200 = vld [vmem:[%s3] sm:$0xff]
        %v201 = vld [vmem:[%s3 + $0x8] sm:$0xff]
        %v202 = vld [vmem:[%s195] sm:$0xff]
        %v203 = vld [vmem:[%s195 + $0x8] sm:$0xff]
        %v204 = vld [vmem:[%s195 + $0x10] sm:$0xff]
        %v205 = vld [vmem:[%s195 + $0x18] sm:$0xff]
        %v206 = vld [vmem:[%s195 + $0x20] sm:$0xff]
        %v207 = vld [vmem:[%s195 + $0x28] sm:$0xff]
        %v208 = vld [vmem:[%s195 + $0x30] sm:$0xff]
        %v209 = vld [vmem:[%s195 + $0x38] sm:$0xff]
        %v210 = vld [vmem:[%s195 + $0x40] sm:$0xff]
        %v211 = vld [vmem:[%s195 + $0x48] sm:$0xff]
        %v212 = vld [vmem:[%s195 + $0x50] sm:$0xff]
        %v213 = vld [vmem:[%s195 + $0x58] sm:$0xff]
        %v214 = vld [vmem:[%s195 + $0x60] sm:$0xff]
        %v215 = vld [vmem:[%s195 + $0x68] sm:$0xff]
        %v216 = vld [vmem:[%s195 + $0x70] sm:$0xff]
        %v217 = vld [vmem:[%s195 + $0x78] sm:$0xff]
        %v218 = vld [vmem:[%s195 + $0x80] sm:$0xff]
        %v219 = vld [vmem:[%s195 + $0x88] sm:$0xff]
        %v220 = vld [vmem:[%s195 + $0x90] sm:$0xff]
        %v221 = vld [vmem:[%s195 + $0x98] sm:$0xff]
        %v222 = vld [vmem:[%s195 + $0xa0] sm:$0xff]
        %v223 = vld [vmem:[%s195 + $0xa8] sm:$0xff]
        %v224 = vld [vmem:[%s195 + $0xb0] sm:$0xff]
        %v225 = vld [vmem:[%s195 + $0xb8] sm:$0xff]
        %v226 = vld [vmem:[%s195 + $0xc0] sm:$0xff]
        %v227 = vld [vmem:[%s195 + $0xc8] sm:$0xff]
        %v228 = vld [vmem:[%s195 + $0xd0] sm:$0xff]
        %v229 = vld [vmem:[%s195 + $0xd8] sm:$0xff]
        %v230 = vld [vmem:[%s195 + $0xe0] sm:$0xff]
        %v231 = vld [vmem:[%s195 + $0xe8] sm:$0xff]
        %v232 = vld [vmem:[%s195 + $0xf0] sm:$0xff]
        %v233 = vld [vmem:[%s195 + $0xf8] sm:$0xff]
        %v250 = vrot.slane %v204, 1
        %v251 = vrot.slane %v202, 1
        %v252 = vrot.slane %v206, 1
        %v253 = vrot.slane %v208, 1
        %v254 = vrot.slane %v210, 1
        %v255 = vrot.slane %v212, 1
        %v256 = vrot.slane %v214, 1
        %v257 = vrot.slane %v216, 1
        %v258 = vrot.slane %v218, 1
        %v259 = vrot.slane %v220, 1
        %v260 = vrot.slane %v222, 1
        %v261 = vrot.slane %v224, 1
        %v262 = vrot.slane %v226, 1
        %v263 = vrot.slane %v228, 1
        %v264 = vrot.slane %v230, 1
        %v265 = vrot.slane %v232, 1
        %vm298 = vcmask 1040384
        %v299 = vrot.slane %v204, 7
        %v300 = vrot.slane %v205, 7
        %v301 = vsel %vm298, %v299, %v300
        %v302 = vrot.slane %v202, 7
        %v303 = vrot.slane %v203, 7
        %v304 = vsel %vm298, %v302, %v303
        %v305 = vrot.slane %v206, 7
        %v306 = vrot.slane %v207, 7
        %v307 = vsel %vm298, %v305, %v306
        %v308 = vrot.slane %v208, 7
        %v309 = vrot.slane %v209, 7
        %v310 = vsel %vm298, %v308, %v309
        %v311 = vrot.slane %v210, 7
        %v312 = vrot.slane %v211, 7
        %v313 = vsel %vm298, %v311, %v312
        %v314 = vrot.slane %v212, 7
        %v315 = vrot.slane %v213, 7
        %v316 = vsel %vm298, %v314, %v315
        %v317 = vrot.slane %v214, 7
        %v318 = vrot.slane %v215, 7
        %v319 = vsel %vm298, %v317, %v318
        %v320 = vrot.slane %v216, 7
        %v321 = vrot.slane %v217, 7
        %v322 = vsel %vm298, %v320, %v321
        %v323 = vrot.slane %v218, 7
        %v324 = vrot.slane %v219, 7
        %v325 = vsel %vm298, %v323, %v324
        %v326 = vrot.slane %v220, 7
        %v327 = vrot.slane %v221, 7
        %v328 = vsel %vm298, %v326, %v327
        %v329 = vrot.slane %v222, 7
        %v330 = vrot.slane %v223, 7
        %v331 = vsel %vm298, %v329, %v330
        %v332 = vrot.slane %v224, 7
        %v333 = vrot.slane %v225, 7
        %v334 = vsel %vm298, %v332, %v333
        %v335 = vrot.slane %v226, 7
        %v336 = vrot.slane %v227, 7
        %v337 = vsel %vm298, %v335, %v336
        %v338 = vrot.slane %v228, 7
        %v339 = vrot.slane %v229, 7
        %v340 = vsel %vm298, %v338, %v339
        %v341 = vrot.slane %v230, 7
        %v342 = vrot.slane %v231, 7
        %v343 = vsel %vm298, %v341, %v342
        %v344 = vrot.slane %v232, 7
        %v345 = vrot.slane %v233, 7
        %v346 = vsel %vm298, %v344, %v345
        %v395 = vrot.slane %v205, 5
        %v396 = vrot.slane %v203, 5
        %v397 = vrot.slane %v207, 5
        %v398 = vrot.slane %v209, 5
        %v399 = vrot.slane %v211, 5
        %v400 = vrot.slane %v213, 5
        %v401 = vrot.slane %v215, 5
        %v402 = vrot.slane %v217, 5
        %v403 = vrot.slane %v219, 5
        %v404 = vrot.slane %v221, 5
        %v405 = vrot.slane %v223, 5
        %v406 = vrot.slane %v225, 5
        %v407 = vrot.slane %v227, 5
        %v408 = vrot.slane %v229, 5
        %v409 = vrot.slane %v231, 5
        %v410 = vrot.slane %v233, 5
        %v427 = vsel %vm298, %v250, %v299
        %v428 = vsel %vm298, %v251, %v302
        %v429 = vsel %vm298, %v252, %v305
        %v430 = vsel %vm298, %v253, %v308
        %v431 = vsel %vm298, %v254, %v311
        %v432 = vsel %vm298, %v255, %v314
        %v433 = vsel %vm298, %v256, %v317
        %v434 = vsel %vm298, %v257, %v320
        %v435 = vsel %vm298, %v258, %v323
        %v436 = vsel %vm298, %v259, %v326
        %v437 = vsel %vm298, %v260, %v329
        %v438 = vsel %vm298, %v261, %v332
        %v439 = vsel %vm298, %v262, %v335
        %v440 = vsel %vm298, %v263, %v338
        %v441 = vsel %vm298, %v264, %v341
        %v442 = vsel %vm298, %v265, %v344
        %v443 = vsel %vm298, %v300, %v395
        %v444 = vsel %vm298, %v303, %v396
        %v445 = vsel %vm298, %v306, %v397
        %v446 = vsel %vm298, %v309, %v398
        %v447 = vsel %vm298, %v312, %v399
        %v448 = vsel %vm298, %v315, %v400
        %v449 = vsel %vm298, %v318, %v401
        %v450 = vsel %vm298, %v321, %v402
        %v451 = vsel %vm298, %v324, %v403
        %v452 = vsel %vm298, %v327, %v404
        %v453 = vsel %vm298, %v330, %v405
        %v454 = vsel %vm298, %v333, %v406
        %v455 = vsel %vm298, %v336, %v407
        %v456 = vsel %vm298, %v339, %v408
        %v457 = vsel %vm298, %v342, %v409
        %v458 = vsel %vm298, %v345, %v410
        %vm491 = vcmask 1046528
        %v492 = vrot.slane %v427, 1
        %v493 = vrot.slane %v301, 1
        %v494 = vsel %vm491, %v492, %v493
        %v495 = vrot.slane %v443, 1
        %v496 = vsel %vm491, %v493, %v495
        %v497 = vrot.slane %v428, 1
        %v498 = vrot.slane %v304, 1
        %v499 = vsel %vm491, %v497, %v498
        %v500 = vrot.slane %v444, 1
        %v501 = vsel %vm491, %v498, %v500
        %v502 = vrot.slane %v429, 1
        %v503 = vrot.slane %v307, 1
        %v504 = vsel %vm491, %v502, %v503
        %v505 = vrot.slane %v445, 1
        %v506 = vsel %vm491, %v503, %v505
        %v507 = vrot.slane %v430, 1
        %v508 = vrot.slane %v310, 1
        %v509 = vsel %vm491, %v507, %v508
        %v510 = vrot.slane %v446, 1
        %v511 = vsel %vm491, %v508, %v510
        %v512 = vrot.slane %v431, 1
        %v513 = vrot.slane %v313, 1
        %v514 = vsel %vm491, %v512, %v513
        %v515 = vrot.slane %v447, 1
        %v516 = vsel %vm491, %v513, %v515
        %v517 = vrot.slane %v432, 1
        %v518 = vrot.slane %v316, 1
        %v519 = vsel %vm491, %v517, %v518
        %v520 = vrot.slane %v448, 1
        %v521 = vsel %vm491, %v518, %v520
        %v522 = vrot.slane %v433, 1
        %v523 = vrot.slane %v319, 1
        %v524 = vsel %vm491, %v522, %v523
        %v525 = vrot.slane %v449, 1
        %v526 = vsel %vm491, %v523, %v525
        %v527 = vrot.slane %v434, 1
        %v528 = vrot.slane %v322, 1
        %v529 = vsel %vm491, %v527, %v528
        %v530 = vrot.slane %v450, 1
        %v531 = vsel %vm491, %v528, %v530
        %v532 = vrot.slane %v435, 1
        %v533 = vrot.slane %v325, 1
        %v534 = vsel %vm491, %v532, %v533
        %v535 = vrot.slane %v451, 1
        %v536 = vsel %vm491, %v533, %v535
        %v537 = vrot.slane %v436, 1
        %v538 = vrot.slane %v328, 1
        %v539 = vsel %vm491, %v537, %v538
        %v540 = vrot.slane %v452, 1
        %v541 = vsel %vm491, %v538, %v540
        %v542 = vrot.slane %v437, 1
        %v543 = vrot.slane %v331, 1
        %v544 = vsel %vm491, %v542, %v543
        %v545 = vrot.slane %v453, 1
        %v546 = vsel %vm491, %v543, %v545
        %v547 = vrot.slane %v438, 1
        %v548 = vrot.slane %v334, 1
        %v549 = vsel %vm491, %v547, %v548
        %v550 = vrot.slane %v454, 1
        %v551 = vsel %vm491, %v548, %v550
        %v552 = vrot.slane %v439, 1
        %v553 = vrot.slane %v337, 1
        %v554 = vsel %vm491, %v552, %v553
        %v555 = vrot.slane %v455, 1
        %v556 = vsel %vm491, %v553, %v555
        %v557 = vrot.slane %v440, 1
        %v558 = vrot.slane %v340, 1
        %v559 = vsel %vm491, %v557, %v558
        %v560 = vrot.slane %v456, 1
        %v561 = vsel %vm491, %v558, %v560
        %v562 = vrot.slane %v441, 1
        %v563 = vrot.slane %v343, 1
        %v564 = vsel %vm491, %v562, %v563
        %v565 = vrot.slane %v457, 1
        %v566 = vsel %vm491, %v563, %v565
        %v567 = vrot.slane %v442, 1
        %v568 = vrot.slane %v346, 1
        %v569 = vsel %vm491, %v567, %v568
        %v570 = vrot.slane %v458, 1
        %v571 = vsel %vm491, %v568, %v570
        %572 = vrot.lane.b32.xlu0 %v494, 4
        %v573 = vpop.permute.xlu0 %572
        %574 = vrot.lane.b32.xlu0 %v496, 4
        %v575 = vpop.permute.xlu0 %574
        %576 = vrot.lane.b32.xlu0 %v499, 4
        %v577 = vpop.permute.xlu0 %576
        %578 = vrot.lane.b32.xlu0 %v501, 4
        %v579 = vpop.permute.xlu0 %578
        %580 = vrot.lane.b32.xlu0 %v504, 4
        %v581 = vpop.permute.xlu0 %580
        %582 = vrot.lane.b32.xlu0 %v506, 4
        %v583 = vpop.permute.xlu0 %582
        %584 = vrot.lane.b32.xlu0 %v509, 4
        %v585 = vpop.permute.xlu0 %584
        %586 = vrot.lane.b32.xlu0 %v511, 4
        %v587 = vpop.permute.xlu0 %586
        %588 = vrot.lane.b32.xlu0 %v514, 4
        %v589 = vpop.permute.xlu0 %588
        %590 = vrot.lane.b32.xlu0 %v516, 4
        %v591 = vpop.permute.xlu0 %590
        %592 = vrot.lane.b32.xlu0 %v519, 4
        %v593 = vpop.permute.xlu0 %592
        %594 = vrot.lane.b32.xlu0 %v521, 4
        %v595 = vpop.permute.xlu0 %594
        %596 = vrot.lane.b32.xlu0 %v524, 4
        %v597 = vpop.permute.xlu0 %596
        %598 = vrot.lane.b32.xlu0 %v526, 4
        %v599 = vpop.permute.xlu0 %598
        %600 = vrot.lane.b32.xlu0 %v529, 4
        %v601 = vpop.permute.xlu0 %600
        %602 = vrot.lane.b32.xlu0 %v531, 4
        %v603 = vpop.permute.xlu0 %602
        %604 = vrot.lane.b32.xlu0 %v534, 4
        %v605 = vpop.permute.xlu0 %604
        %606 = vrot.lane.b32.xlu0 %v536, 4
        %v607 = vpop.permute.xlu0 %606
        %608 = vrot.lane.b32.xlu0 %v539, 4
        %v609 = vpop.permute.xlu0 %608
        %610 = vrot.lane.b32.xlu0 %v541, 4
        %v611 = vpop.permute.xlu0 %610
        %612 = vrot.lane.b32.xlu0 %v544, 4
        %v613 = vpop.permute.xlu0 %612
        %614 = vrot.lane.b32.xlu0 %v546, 4
        %v615 = vpop.permute.xlu0 %614
        %616 = vrot.lane.b32.xlu0 %v549, 4
        %v617 = vpop.permute.xlu0 %616
        %618 = vrot.lane.b32.xlu0 %v551, 4
        %v619 = vpop.permute.xlu0 %618
        %620 = vrot.lane.b32.xlu0 %v554, 4
        %v621 = vpop.permute.xlu0 %620
        %622 = vrot.lane.b32.xlu0 %v556, 4
        %v623 = vpop.permute.xlu0 %622
        %624 = vrot.lane.b32.xlu0 %v559, 4
        %v625 = vpop.permute.xlu0 %624
        %626 = vrot.lane.b32.xlu0 %v561, 4
        %v627 = vpop.permute.xlu0 %626
        %628 = vrot.lane.b32.xlu0 %v564, 4
        %v629 = vpop.permute.xlu0 %628
        %630 = vrot.lane.b32.xlu0 %v566, 4
        %v631 = vpop.permute.xlu0 %630
        %632 = vrot.lane.b32.xlu0 %v569, 4
        %v633 = vpop.permute.xlu0 %632
        %634 = vrot.lane.b32.xlu0 %v571, 4
        %v635 = vpop.permute.xlu0 %634
        %vm668 = vcmask 1045504
        %v669 = vrot.slane %v427, 2
        %v670 = vrot.slane %v301, 2
        %v671 = vsel %vm668, %v669, %v670
        %v672 = vrot.slane %v443, 2
        %v673 = vsel %vm668, %v670, %v672
        %v674 = vrot.slane %v428, 2
        %v675 = vrot.slane %v304, 2
        %v676 = vsel %vm668, %v674, %v675
        %v677 = vrot.slane %v444, 2
        %v678 = vsel %vm668, %v675, %v677
        %v679 = vrot.slane %v429, 2
        %v680 = vrot.slane %v307, 2
        %v681 = vsel %vm668, %v679, %v680
        %v682 = vrot.slane %v445, 2
        %v683 = vsel %vm668, %v680, %v682
        %v684 = vrot.slane %v430, 2
        %v685 = vrot.slane %v310, 2
        %v686 = vsel %vm668, %v684, %v685
        %v687 = vrot.slane %v446, 2
        %v688 = vsel %vm668, %v685, %v687
        %v689 = vrot.slane %v431, 2
        %v690 = vrot.slane %v313, 2
        %v691 = vsel %vm668, %v689, %v690
        %v692 = vrot.slane %v447, 2
        %v693 = vsel %vm668, %v690, %v692
        %v694 = vrot.slane %v432, 2
        %v695 = vrot.slane %v316, 2
        %v696 = vsel %vm668, %v694, %v695
        %v697 = vrot.slane %v448, 2
        %v698 = vsel %vm668, %v695, %v697
        %v699 = vrot.slane %v433, 2
        %v700 = vrot.slane %v319, 2
        %v701 = vsel %vm668, %v699, %v700
        %v702 = vrot.slane %v449, 2
        %v703 = vsel %vm668, %v700, %v702
        %v704 = vrot.slane %v434, 2
        %v705 = vrot.slane %v322, 2
        %v706 = vsel %vm668, %v704, %v705
        %v707 = vrot.slane %v450, 2
        %v708 = vsel %vm668, %v705, %v707
        %v709 = vrot.slane %v435, 2
        %v710 = vrot.slane %v325, 2
        %v711 = vsel %vm668, %v709, %v710
        %v712 = vrot.slane %v451, 2
        %v713 = vsel %vm668, %v710, %v712
        %v714 = vrot.slane %v436, 2
        %v715 = vrot.slane %v328, 2
        %v716 = vsel %vm668, %v714, %v715
        %v717 = vrot.slane %v452, 2
        %v718 = vsel %vm668, %v715, %v717
        %v719 = vrot.slane %v437, 2
        %v720 = vrot.slane %v331, 2
        %v721 = vsel %vm668, %v719, %v720
        %v722 = vrot.slane %v453, 2
        %v723 = vsel %vm668, %v720, %v722
        %v724 = vrot.slane %v438, 2
        %v725 = vrot.slane %v334, 2
        %v726 = vsel %vm668, %v724, %v725
        %v727 = vrot.slane %v454, 2
        %v728 = vsel %vm668, %v725, %v727
        %v729 = vrot.slane %v439, 2
        %v730 = vrot.slane %v337, 2
        %v731 = vsel %vm668, %v729, %v730
        %v732 = vrot.slane %v455, 2
        %v733 = vsel %vm668, %v730, %v732
        %v734 = vrot.slane %v440, 2
        %v735 = vrot.slane %v340, 2
        %v736 = vsel %vm668, %v734, %v735
        %v737 = vrot.slane %v456, 2
        %v738 = vsel %vm668, %v735, %v737
        %v739 = vrot.slane %v441, 2
        %v740 = vrot.slane %v343, 2
        %v741 = vsel %vm668, %v739, %v740
        %v742 = vrot.slane %v457, 2
        %v743 = vsel %vm668, %v740, %v742
        %v744 = vrot.slane %v442, 2
        %v745 = vrot.slane %v346, 2
        %v746 = vsel %vm668, %v744, %v745
        %v747 = vrot.slane %v458, 2
        %v748 = vsel %vm668, %v745, %v747
        %749 = vrot.lane.b32.xlu0 %v671, 8
        %v750 = vpop.permute.xlu0 %749
        %751 = vrot.lane.b32.xlu0 %v673, 8
        %v752 = vpop.permute.xlu0 %751
        %753 = vrot.lane.b32.xlu0 %v676, 8
        %v754 = vpop.permute.xlu0 %753
        %755 = vrot.lane.b32.xlu0 %v678, 8
        %v756 = vpop.permute.xlu0 %755
        %757 = vrot.lane.b32.xlu0 %v681, 8
        %v758 = vpop.permute.xlu0 %757
        %759 = vrot.lane.b32.xlu0 %v683, 8
        %v760 = vpop.permute.xlu0 %759
        %761 = vrot.lane.b32.xlu0 %v686, 8
        %v762 = vpop.permute.xlu0 %761
        %763 = vrot.lane.b32.xlu0 %v688, 8
        %v764 = vpop.permute.xlu0 %763
        %765 = vrot.lane.b32.xlu0 %v691, 8
        %v766 = vpop.permute.xlu0 %765
        %767 = vrot.lane.b32.xlu0 %v693, 8
        %v768 = vpop.permute.xlu0 %767
        %769 = vrot.lane.b32.xlu0 %v696, 8
        %v770 = vpop.permute.xlu0 %769
        %771 = vrot.lane.b32.xlu0 %v698, 8
        %v772 = vpop.permute.xlu0 %771
        %773 = vrot.lane.b32.xlu0 %v701, 8
        %v774 = vpop.permute.xlu0 %773
        %775 = vrot.lane.b32.xlu0 %v703, 8
        %v776 = vpop.permute.xlu0 %775
        %777 = vrot.lane.b32.xlu0 %v706, 8
        %v778 = vpop.permute.xlu0 %777
        %779 = vrot.lane.b32.xlu0 %v708, 8
        %v780 = vpop.permute.xlu0 %779
        %781 = vrot.lane.b32.xlu0 %v711, 8
        %v782 = vpop.permute.xlu0 %781
        %783 = vrot.lane.b32.xlu0 %v713, 8
        %v784 = vpop.permute.xlu0 %783
        %785 = vrot.lane.b32.xlu0 %v716, 8
        %v786 = vpop.permute.xlu0 %785
        %787 = vrot.lane.b32.xlu0 %v718, 8
        %v788 = vpop.permute.xlu0 %787
        %789 = vrot.lane.b32.xlu0 %v721, 8
        %v790 = vpop.permute.xlu0 %789
        %791 = vrot.lane.b32.xlu0 %v723, 8
        %v792 = vpop.permute.xlu0 %791
        %793 = vrot.lane.b32.xlu0 %v726, 8
        %v794 = vpop.permute.xlu0 %793
        %795 = vrot.lane.b32.xlu0 %v728, 8
        %v796 = vpop.permute.xlu0 %795
        %797 = vrot.lane.b32.xlu0 %v731, 8
        %v798 = vpop.permute.xlu0 %797
        %799 = vrot.lane.b32.xlu0 %v733, 8
        %v800 = vpop.permute.xlu0 %799
        %801 = vrot.lane.b32.xlu0 %v736, 8
        %v802 = vpop.permute.xlu0 %801
        %803 = vrot.lane.b32.xlu0 %v738, 8
        %v804 = vpop.permute.xlu0 %803
        %805 = vrot.lane.b32.xlu0 %v741, 8
        %v806 = vpop.permute.xlu0 %805
        %807 = vrot.lane.b32.xlu0 %v743, 8
        %v808 = vpop.permute.xlu0 %807
        %809 = vrot.lane.b32.xlu0 %v746, 8
        %v810 = vpop.permute.xlu0 %809
        %811 = vrot.lane.b32.xlu0 %v748, 8
        %v812 = vpop.permute.xlu0 %811
        %vm845 = vcmask 31744
        %v846 = vsel %vm845, %v427, %v573
        %v847 = vsel %vm845, %v301, %v575
        %v848 = vsel %vm845, %v428, %v577
        %v849 = vsel %vm845, %v304, %v579
        %v850 = vsel %vm845, %v429, %v581
        %v851 = vsel %vm845, %v307, %v583
        %v852 = vsel %vm845, %v430, %v585
        %v853 = vsel %vm845, %v310, %v587
        %v854 = vsel %vm845, %v431, %v589
        %v855 = vsel %vm845, %v313, %v591
        %v856 = vsel %vm845, %v432, %v593
        %v857 = vsel %vm845, %v316, %v595
        %v858 = vsel %vm845, %v433, %v597
        %v859 = vsel %vm845, %v319, %v599
        %v860 = vsel %vm845, %v434, %v601
        %v861 = vsel %vm845, %v322, %v603
        %v862 = vsel %vm845, %v435, %v605
        %v863 = vsel %vm845, %v325, %v607
        %v864 = vsel %vm845, %v436, %v609
        %v865 = vsel %vm845, %v328, %v611
        %v866 = vsel %vm845, %v437, %v613
        %v867 = vsel %vm845, %v331, %v615
        %v868 = vsel %vm845, %v438, %v617
        %v869 = vsel %vm845, %v334, %v619
        %v870 = vsel %vm845, %v439, %v621
        %v871 = vsel %vm845, %v337, %v623
        %v872 = vsel %vm845, %v440, %v625
        %v873 = vsel %vm845, %v340, %v627
        %v874 = vsel %vm845, %v441, %v629
        %v875 = vsel %vm845, %v343, %v631
        %v876 = vsel %vm845, %v442, %v633
        %v877 = vsel %vm845, %v346, %v635
        %vm878 = vcmask 64512
        %v879 = vsel %vm878, %v846, %v750
        %v880 = vsel %vm878, %v847, %v752
        %v881 = vsel %vm878, %v848, %v754
        %v882 = vsel %vm878, %v849, %v756
        %v883 = vsel %vm878, %v850, %v758
        %v884 = vsel %vm878, %v851, %v760
        %v885 = vsel %vm878, %v852, %v762
        %v886 = vsel %vm878, %v853, %v764
        %v887 = vsel %vm878, %v854, %v766
        %v888 = vsel %vm878, %v855, %v768
        %v889 = vsel %vm878, %v856, %v770
        %v890 = vsel %vm878, %v857, %v772
        %v891 = vsel %vm878, %v858, %v774
        %v892 = vsel %vm878, %v859, %v776
        %v893 = vsel %vm878, %v860, %v778
        %v894 = vsel %vm878, %v861, %v780
        %v895 = vsel %vm878, %v862, %v782
        %v896 = vsel %vm878, %v863, %v784
        %v897 = vsel %vm878, %v864, %v786
        %v898 = vsel %vm878, %v865, %v788
        %v899 = vsel %vm878, %v866, %v790
        %v900 = vsel %vm878, %v867, %v792
        %v901 = vsel %vm878, %v868, %v794
        %v902 = vsel %vm878, %v869, %v796
        %v903 = vsel %vm878, %v870, %v798
        %v904 = vsel %vm878, %v871, %v800
        %v905 = vsel %vm878, %v872, %v802
        %v906 = vsel %vm878, %v873, %v804
        %v907 = vsel %vm878, %v874, %v806
        %v908 = vsel %vm878, %v875, %v808
        %v909 = vsel %vm878, %v876, %v810
        %v910 = vsel %vm878, %v877, %v812
        %vm911 = vcmask 97280
        %v912 = vsel %vm911, %v879, 1.0
        %v913 = vsel %vm911, %v880, 1.0
        %v914 = vsel %vm911, %v881, 1.0
        %v915 = vsel %vm911, %v882, 1.0
        %v916 = vsel %vm911, %v883, 1.0
        %v917 = vsel %vm911, %v884, 1.0
        %v918 = vsel %vm911, %v885, 1.0
        %v919 = vsel %vm911, %v886, 1.0
        %v920 = vsel %vm911, %v887, 1.0
        %v921 = vsel %vm911, %v888, 1.0
        %v922 = vsel %vm911, %v889, 1.0
        %v923 = vsel %vm911, %v890, 1.0
        %v924 = vsel %vm911, %v891, 1.0
        %v925 = vsel %vm911, %v892, 1.0
        %v926 = vsel %vm911, %v893, 1.0
        %v927 = vsel %vm911, %v894, 1.0
        %v928 = vsel %vm911, %v895, 1.0
        %v929 = vsel %vm911, %v896, 1.0
        %v930 = vsel %vm911, %v897, 1.0
        %v931 = vsel %vm911, %v898, 1.0
        %v932 = vsel %vm911, %v899, 1.0
        %v933 = vsel %vm911, %v900, 1.0
        %v934 = vsel %vm911, %v901, 1.0
        %v935 = vsel %vm911, %v902, 1.0
        %v936 = vsel %vm911, %v903, 1.0
        %v937 = vsel %vm911, %v904, 1.0
        %v938 = vsel %vm911, %v905, 1.0
        %v939 = vsel %vm911, %v906, 1.0
        %v940 = vsel %vm911, %v907, 1.0
        %v941 = vsel %vm911, %v908, 1.0
        %v942 = vsel %vm911, %v909, 1.0
        %v943 = vsel %vm911, %v910, 1.0
        %v944 = vld [vmem:[%s1] sm:$0xff]
        %v945 = vld [vmem:[%s1 + $0x8] sm:$0xff]
        %v946 = vld [vmem:[%s1 + $0x10] sm:$0xff]
        %v947 = vld [vmem:[%s1 + $0x18] sm:$0xff]
        %952 = vrot.lane.b32.xlu0 %v944, 115
        %v953 = vpop.permute.xlu0 %952
        %954 = vrot.lane.b32.xlu0 %v945, 115
        %v955 = vpop.permute.xlu0 %954
        %956 = vrot.lane.b32.xlu0 %v946, 115
        %v957 = vpop.permute.xlu0 %956
        %958 = vrot.lane.b32.xlu0 %v947, 115
        %v959 = vpop.permute.xlu0 %958
        %vm960 = vcmask 105472
        %v961 = vsel %vm960, %v953, 0
        %v963 = vsel %vm960, %v955, 0
        %v965 = vsel %vm960, %v957, 0
        %v967 = vsel %vm960, %v959, 0
        %v970 = vsel %vm960, %v914, 0
        %v973 = vsel %vm960, %v915, 0
        %v976 = vsel %vm960, %v912, 0
        %v979 = vsel %vm960, %v913, 0
        %v982 = vsel %vm960, %v916, 0
        %v985 = vsel %vm960, %v917, 0
        %v988 = vsel %vm960, %v918, 0
        %v991 = vsel %vm960, %v919, 0
        %v994 = vsel %vm960, %v920, 0
        %v997 = vsel %vm960, %v921, 0
        %v1000 = vsel %vm960, %v922, 0
        %v1003 = vsel %vm960, %v923, 0
        %v1006 = vsel %vm960, %v924, 0
        %v1009 = vsel %vm960, %v925, 0
        %v1012 = vsel %vm960, %v926, 0
        %v1015 = vsel %vm960, %v927, 0
        %v1018 = vsel %vm960, %v928, 0
        %v1021 = vsel %vm960, %v929, 0
        %v1024 = vsel %vm960, %v930, 0
        %v1027 = vsel %vm960, %v931, 0
        %v1030 = vsel %vm960, %v932, 0
        %v1033 = vsel %vm960, %v933, 0
        %v1036 = vsel %vm960, %v934, 0
        %v1039 = vsel %vm960, %v935, 0
        %v1042 = vsel %vm960, %v936, 0
        %v1045 = vsel %vm960, %v937, 0
        %v1048 = vsel %vm960, %v938, 0
        %v1051 = vsel %vm960, %v939, 0
        %v1054 = vsel %vm960, %v940, 0
        %v1057 = vsel %vm960, %v941, 0
        %v1060 = vsel %vm960, %v942, 0
        %v1063 = vsel %vm960, %v943, 0
        %1065 = vmatprep.subr.mxu0 0.0
        %1066 = vmatpush1.xpose.msra.mxu0 %v970
        %1067 = vmatprep.subr.mxu0 0.0
        %1068 = vmatpush1.xpose.msra.mxu0 %v973
        %1069 = vmatprep.subr.mxu0 0.0
        %1070 = vmatpush1.xpose.msra.mxu0 %v976
        %1071 = vmatprep.subr.mxu0 0.0
        %1072 = vmatpush1.xpose.msra.mxu0 %v979
        %1073 = vmatprep.subr.mxu0 0.0
        %1074 = vmatpush1.xpose.msra.mxu0 %v982
        %1075 = vmatprep.subr.mxu0 0.0
        %1076 = vmatpush1.xpose.msra.mxu0 %v985
        %1077 = vmatprep.subr.mxu0 0.0
        %1078 = vmatpush1.xpose.msra.mxu0 %v988
        %1079 = vmatprep.subr.mxu0 0.0
        %1080 = vmatpush1.xpose.msra.mxu0 %v991
        %1081 = vmatprep.subr.mxu0 0.0
        %1082 = vmatpush1.xpose.msra.mxu0 %v994
        %1083 = vmatprep.subr.mxu0 0.0
        %1084 = vmatpush1.xpose.msra.mxu0 %v997
        %1085 = vmatprep.subr.mxu0 0.0
        %1086 = vmatpush1.xpose.msra.mxu0 %v1000
        %1087 = vmatprep.subr.mxu0 0.0
        %1088 = vmatpush1.xpose.msra.mxu0 %v1003
        %1089 = vmatprep.subr.mxu0 0.0
        %1090 = vmatpush1.xpose.msra.mxu0 %v1006
        %1091 = vmatprep.subr.mxu0 0.0
        %1092 = vmatpush1.xpose.msra.mxu0 %v1009
        %1093 = vmatprep.subr.mxu0 0.0
        %1094 = vmatpush1.xpose.msra.mxu0 %v1012
        %1095 = vmatprep.subr.mxu0 0.0
        %1096 = vmatpush1.xpose.msra.mxu0 %v1015
        %1097 = vmatprep.subr.mxu0 0.0
        %1098 = vmatpush1.xpose.msra.mxu0 %v1018
        %1099 = vmatprep.subr.mxu0 0.0
        %1100 = vmatpush1.xpose.msra.mxu0 %v1021
        %1101 = vmatprep.subr.mxu0 0.0
        %1102 = vmatpush1.xpose.msra.mxu0 %v1024
        %1103 = vmatprep.subr.mxu0 0.0
        %1104 = vmatpush1.xpose.msra.mxu0 %v1027
        %1105 = vmatprep.subr.mxu0 0.0
        %1106 = vmatpush1.xpose.msra.mxu0 %v1030
        %1107 = vmatprep.subr.mxu0 0.0
        %1108 = vmatpush1.xpose.msra.mxu0 %v1033
        %1109 = vmatprep.subr.mxu0 0.0
        %1110 = vmatpush1.xpose.msra.mxu0 %v1036
        %1111 = vmatprep.subr.mxu0 0.0
        %1112 = vmatpush1.xpose.msra.mxu0 %v1039
        %1113 = vmatprep.subr.mxu0 0.0
        %1114 = vmatpush1.xpose.msra.mxu0 %v1042
        %1115 = vmatprep.subr.mxu0 0.0
        %1116 = vmatpush1.xpose.msra.mxu0 %v1045
        %1117 = vmatprep.subr.mxu0 0.0
        %1118 = vmatpush1.xpose.msra.mxu0 %v1048
        %1119 = vmatprep.subr.mxu0 0.0
        %1120 = vmatpush1.xpose.msra.mxu0 %v1051
        %1121 = vmatprep.subr.mxu0 0.0
        %1122 = vmatpush1.xpose.msra.mxu0 %v1054
        %1123 = vmatprep.subr.mxu0 0.0
        %1124 = vmatpush1.xpose.msra.mxu0 %v1057
        %1125 = vmatprep.subr.mxu0 0.0
        %1126 = vmatpush1.xpose.msra.mxu0 %v1060
        %1127 = vmatprep.subr.mxu0 0.0
        %1128 = vmatpush1.xpose.msra.mxu0 %v1063
        %1129 = vmatprep.mubr.f32.mxu0 0.0
        %1130 = vmatmul.mubr.f32.gmra.mrb[0].mxu0 %v961
        %v1131 = vpop.f32.mrb[0].mxu0
        %v1132 = vadd.f32 0.0, %v1131
        %v1133 = vpop.f32.mrb[0].mxu0
        %v1134 = vadd.f32 0.0, %v1133
        %1135 = vmatprep.mubr.f32.mxu0 0.0
        %1136 = vmatmul.mubr.f32.gmra.mrb[0].mxu0 %v963
        %v1137 = vpop.f32.mrb[0].mxu0
        %v1138 = vadd.f32 0.0, %v1137
        %v1139 = vpop.f32.mrb[0].mxu0
        %v1140 = vadd.f32 0.0, %v1139
        %1141 = vmatprep.mubr.f32.mxu0 0.0
        %1142 = vmatmul.mubr.f32.gmra.mrb[0].mxu0 %v965
        %v1143 = vpop.f32.mrb[0].mxu0
        %v1144 = vadd.f32 0.0, %v1143
        %v1145 = vpop.f32.mrb[0].mxu0
        %v1146 = vadd.f32 0.0, %v1145
        %1147 = vmatprep.mubr.f32.mxu0 0.0
        %1148 = vmatmul.mubr.f32.gmra.mrb[0].mxu0 %v967
        %v1149 = vpop.f32.mrb[0].mxu0
        %v1150 = vadd.f32 0.0, %v1149
        %v1151 = vpop.f32.mrb[0].mxu0
        %v1152 = vadd.f32 0.0, %v1151
        %1153 = vdwg.mxu0
        %v1154 = vsel %vm960, %v944, 0
        %v1156 = vsel %vm960, %v945, 0
        %v1158 = vsel %vm960, %v946, 0
        %v1160 = vsel %vm960, %v947, 0
        %1162 = vmatprep.subr.mxu0 0.0
        %1163 = vmatpush1.xpose.msra.mxu0 %v976
        %1164 = vmatprep.subr.mxu0 0.0
        %1165 = vmatpush1.xpose.msra.mxu0 %v979
        %1166 = vmatprep.subr.mxu0 0.0
        %1167 = vmatpush1.xpose.msra.mxu0 %v970
        %1168 = vmatprep.subr.mxu0 0.0
        %1169 = vmatpush1.xpose.msra.mxu0 %v973
        %1170 = vmatprep.subr.mxu0 0.0
        %1171 = vmatpush1.xpose.msra.mxu0 %v976
        %1172 = vmatprep.subr.mxu0 0.0
        %1173 = vmatpush1.xpose.msra.mxu0 %v979
        %1174 = vmatprep.subr.mxu0 0.0
        %1175 = vmatpush1.xpose.msra.mxu0 %v982
        %1176 = vmatprep.subr.mxu0 0.0
        %1177 = vmatpush1.xpose.msra.mxu0 %v985
        %1178 = vmatprep.subr.mxu0 0.0
        %1179 = vmatpush1.xpose.msra.mxu0 %v988
        %1180 = vmatprep.subr.mxu0 0.0
        %1181 = vmatpush1.xpose.msra.mxu0 %v991
        %1182 = vmatprep.subr.mxu0 0.0
        %1183 = vmatpush1.xpose.msra.mxu0 %v994
        %1184 = vmatprep.subr.mxu0 0.0
        %1185 = vmatpush1.xpose.msra.mxu0 %v997
        %1186 = vmatprep.subr.mxu0 0.0
        %1187 = vmatpush1.xpose.msra.mxu0 %v1000
        %1188 = vmatprep.subr.mxu0 0.0
        %1189 = vmatpush1.xpose.msra.mxu0 %v1003
        %1190 = vmatprep.subr.mxu0 0.0
        %1191 = vmatpush1.xpose.msra.mxu0 %v1006
        %1192 = vmatprep.subr.mxu0 0.0
        %1193 = vmatpush1.xpose.msra.mxu0 %v1009
        %1194 = vmatprep.subr.mxu0 0.0
        %1195 = vmatpush1.xpose.msra.mxu0 %v1012
        %1196 = vmatprep.subr.mxu0 0.0
        %1197 = vmatpush1.xpose.msra.mxu0 %v1015
        %1198 = vmatprep.subr.mxu0 0.0
        %1199 = vmatpush1.xpose.msra.mxu0 %v1018
        %1200 = vmatprep.subr.mxu0 0.0
        %1201 = vmatpush1.xpose.msra.mxu0 %v1021
        %1202 = vmatprep.subr.mxu0 0.0
        %1203 = vmatpush1.xpose.msra.mxu0 %v1024
        %1204 = vmatprep.subr.mxu0 0.0
        %1205 = vmatpush1.xpose.msra.mxu0 %v1027
        %1206 = vmatprep.subr.mxu0 0.0
        %1207 = vmatpush1.xpose.msra.mxu0 %v1030
        %1208 = vmatprep.subr.mxu0 0.0
        %1209 = vmatpush1.xpose.msra.mxu0 %v1033
        %1210 = vmatprep.subr.mxu0 0.0
        %1211 = vmatpush1.xpose.msra.mxu0 %v1036
        %1212 = vmatprep.subr.mxu0 0.0
        %1213 = vmatpush1.xpose.msra.mxu0 %v1039
        %1214 = vmatprep.subr.mxu0 0.0
        %1215 = vmatpush1.xpose.msra.mxu0 %v1042
        %1216 = vmatprep.subr.mxu0 0.0
        %1217 = vmatpush1.xpose.msra.mxu0 %v1045
        %1218 = vmatprep.subr.mxu0 0.0
        %1219 = vmatpush1.xpose.msra.mxu0 %v1048
        %1220 = vmatprep.subr.mxu0 0.0
        %1221 = vmatpush1.xpose.msra.mxu0 %v1051
        %1222 = vmatprep.subr.mxu0 0.0
        %1223 = vmatpush1.xpose.msra.mxu0 %v1054
        %1224 = vmatprep.subr.mxu0 0.0
        %1225 = vmatpush1.xpose.msra.mxu0 %v1057
        %1226 = vmatprep.mubr.f32.mxu0 0.0
        %1227 = vmatmul.mubr.f32.gmra.mrb[0].mxu0 %v1154
        %v1228 = vpop.f32.mrb[0].mxu0
        %v1229 = vadd.f32 %v1132, %v1228
        %v1230 = vpop.f32.mrb[0].mxu0
        %v1231 = vadd.f32 %v1134, %v1230
        %1232 = vmatprep.mubr.f32.mxu0 0.0
        %1233 = vmatmul.mubr.f32.gmra.mrb[0].mxu0 %v1156
        %v1234 = vpop.f32.mrb[0].mxu0
        %v1235 = vadd.f32 %v1138, %v1234
        %v1236 = vpop.f32.mrb[0].mxu0
        %v1237 = vadd.f32 %v1140, %v1236
        %1238 = vmatprep.mubr.f32.mxu0 0.0
        %1239 = vmatmul.mubr.f32.gmra.mrb[0].mxu0 %v1158
        %v1240 = vpop.f32.mrb[0].mxu0
        %v1241 = vadd.f32 %v1144, %v1240
        %v1242 = vpop.f32.mrb[0].mxu0
        %v1243 = vadd.f32 %v1146, %v1242
        %1244 = vmatprep.mubr.f32.mxu0 0.0
        %1245 = vmatmul.mubr.f32.gmra.mrb[0].mxu0 %v1160
        %v1246 = vpop.f32.mrb[0].mxu0
        %v1247 = vadd.f32 %v1150, %v1246
        %v1248 = vpop.f32.mrb[0].mxu0
        %v1249 = vadd.f32 %v1152, %v1248
        %1250 = vdwg.mxu0
        %1251 = vrot.lane.b32.xlu0 %v944, 102
        %v1252 = vpop.permute.xlu0 %1251
        %1253 = vrot.lane.b32.xlu0 %v945, 102
        %v1254 = vpop.permute.xlu0 %1253
        %1255 = vrot.lane.b32.xlu0 %v946, 102
        %v1256 = vpop.permute.xlu0 %1255
        %1257 = vrot.lane.b32.xlu0 %v947, 102
        %v1258 = vpop.permute.xlu0 %1257
        %v1259 = vsel %vm960, %v1252, 0
        %v1261 = vsel %vm960, %v1254, 0
        %v1263 = vsel %vm960, %v1256, 0
        %v1265 = vsel %vm960, %v1258, 0
        %1267 = vmatprep.subr.mxu0 0.0
        %1268 = vmatpush1.xpose.msra.mxu0 %v976
        %1269 = vmatprep.subr.mxu0 0.0
        %1270 = vmatpush1.xpose.msra.mxu0 %v979
        %1271 = vmatprep.subr.mxu0 0.0
        %1272 = vmatpush1.xpose.msra.mxu0 %v982
        %1273 = vmatprep.subr.mxu0 0.0
        %1274 = vmatpush1.xpose.msra.mxu0 %v985
        %1275 = vmatprep.subr.mxu0 0.0
        %1276 = vmatpush1.xpose.msra.mxu0 %v988
        %1277 = vmatprep.subr.mxu0 0.0
        %1278 = vmatpush1.xpose.msra.mxu0 %v991
        %1279 = vmatprep.subr.mxu0 0.0
        %1280 = vmatpush1.xpose.msra.mxu0 %v994
        %1281 = vmatprep.subr.mxu0 0.0
        %1282 = vmatpush1.xpose.msra.mxu0 %v997
        %1283 = vmatprep.subr.mxu0 0.0
        %1284 = vmatpush1.xpose.msra.mxu0 %v1000
        %1285 = vmatprep.subr.mxu0 0.0
        %1286 = vmatpush1.xpose.msra.mxu0 %v1003
        %1287 = vmatprep.subr.mxu0 0.0
        %1288 = vmatpush1.xpose.msra.mxu0 %v1006
        %1289 = vmatprep.subr.mxu0 0.0
        %1290 = vmatpush1.xpose.msra.mxu0 %v1009
        %1291 = vmatprep.subr.mxu0 0.0
        %1292 = vmatpush1.xpose.msra.mxu0 %v1012
        %1293 = vmatprep.subr.mxu0 0.0
        %1294 = vmatpush1.xpose.msra.mxu0 %v1015
        %1295 = vmatprep.subr.mxu0 0.0
        %1296 = vmatpush1.xpose.msra.mxu0 %v1018
        %1297 = vmatprep.subr.mxu0 0.0
        %1298 = vmatpush1.xpose.msra.mxu0 %v1021
        %1299 = vmatprep.subr.mxu0 0.0
        %1300 = vmatpush1.xpose.msra.mxu0 %v1024
        %1301 = vmatprep.subr.mxu0 0.0
        %1302 = vmatpush1.xpose.msra.mxu0 %v1027
        %1303 = vmatprep.subr.mxu0 0.0
        %1304 = vmatpush1.xpose.msra.mxu0 %v1030
        %1305 = vmatprep.subr.mxu0 0.0
        %1306 = vmatpush1.xpose.msra.mxu0 %v1033
        %1307 = vmatprep.subr.mxu0 0.0
        %1308 = vmatpush1.xpose.msra.mxu0 %v1036
        %1309 = vmatprep.subr.mxu0 0.0
        %1310 = vmatpush1.xpose.msra.mxu0 %v1039
        %1311 = vmatprep.subr.mxu0 0.0
        %1312 = vmatpush1.xpose.msra.mxu0 %v1042
        %1313 = vmatprep.subr.mxu0 0.0
        %1314 = vmatpush1.xpose.msra.mxu0 %v1045
        %1315 = vmatprep.subr.mxu0 0.0
        %1316 = vmatpush1.xpose.msra.mxu0 %v1048
        %1317 = vmatprep.subr.mxu0 0.0
        %1318 = vmatpush1.xpose.msra.mxu0 %v1051
        %1319 = vmatprep.subr.mxu0 0.0
        %1320 = vmatpush1.xpose.msra.mxu0 %v1054
        %1321 = vmatprep.subr.mxu0 0.0
        %1322 = vmatpush1.xpose.msra.mxu0 %v1057
        %1323 = vmatprep.subr.mxu0 0.0
        %1324 = vmatpush1.xpose.msra.mxu0 %v1060
        %1325 = vmatprep.subr.mxu0 0.0
        %1326 = vmatpush1.xpose.msra.mxu0 %v1063
        %1327 = vmatprep.subr.mxu0 0.0
        %1328 = vmatpush1.xpose.msra.mxu0 %v1054
        %1329 = vmatprep.subr.mxu0 0.0
        %1330 = vmatpush1.xpose.msra.mxu0 %v1057
        %1331 = vmatprep.mubr.f32.mxu0 0.0
        %1332 = vmatmul.mubr.f32.gmra.mrb[0].mxu0 %v1259
        %v1333 = vpop.f32.mrb[0].mxu0
        %v1334 = vadd.f32 0.0, %v1333
        %v1335 = vpop.f32.mrb[0].mxu0
        %v1336 = vadd.f32 0.0, %v1335
        %1337 = vmatprep.mubr.f32.mxu0 0.0
        %1338 = vmatmul.mubr.f32.gmra.mrb[0].mxu0 %v1261
        %v1339 = vpop.f32.mrb[0].mxu0
        %v1340 = vadd.f32 0.0, %v1339
        %v1341 = vpop.f32.mrb[0].mxu0
        %v1342 = vadd.f32 0.0, %v1341
        %1343 = vmatprep.mubr.f32.mxu0 0.0
        %1344 = vmatmul.mubr.f32.gmra.mrb[0].mxu0 %v1263
        %v1345 = vpop.f32.mrb[0].mxu0
        %v1346 = vadd.f32 0.0, %v1345
        %v1347 = vpop.f32.mrb[0].mxu0
        %v1348 = vadd.f32 0.0, %v1347
        %1349 = vmatprep.mubr.f32.mxu0 0.0
        %1350 = vmatmul.mubr.f32.gmra.mrb[0].mxu0 %v1265
        %v1351 = vpop.f32.mrb[0].mxu0
        %v1352 = vadd.f32 0.0, %v1351
        %v1353 = vpop.f32.mrb[0].mxu0
        %v1354 = vadd.f32 0.0, %v1353
        %1355 = vdwg.mxu0
        %v1356 = vadd.f32 %v1229, %v1334
        %v1357 = vadd.f32 %v1231, %v1336
        %v1358 = vadd.f32 %v1235, %v1340
        %v1359 = vadd.f32 %v1237, %v1342
        %v1360 = vadd.f32 %v1241, %v1346
        %v1361 = vadd.f32 %v1243, %v1348
        %v1362 = vadd.f32 %v1247, %v1352
        %v1363 = vadd.f32 %v1249, %v1354
        %vm1364 = vcmp.gt.f32.partialorder %v1356, 0.0
        %vm1365 = vcmp.gt.f32.partialorder %v1357, 0.0
        %vm1366 = vcmp.gt.f32.partialorder %v1358, 0.0
        %vm1367 = vcmp.gt.f32.partialorder %v1359, 0.0
        %vm1368 = vcmp.gt.f32.partialorder %v1360, 0.0
        %vm1369 = vcmp.gt.f32.partialorder %v1361, 0.0
        %vm1370 = vcmp.gt.f32.partialorder %v1362, 0.0
        %vm1371 = vcmp.gt.f32.partialorder %v1363, 0.0
        %v1372 = vmin.f32 %v1356, 0.0
        %v1373 = vmin.f32 %v1357, 0.0
        %v1374 = vmin.f32 %v1358, 0.0
        %v1375 = vmin.f32 %v1359, 0.0
        %v1376 = vmin.f32 %v1360, 0.0
        %v1377 = vmin.f32 %v1361, 0.0
        %v1378 = vmin.f32 %v1362, 0.0
        %v1379 = vmin.f32 %v1363, 0.0
        %v1380 = vmul.f32 %v1372, 1.442695
        %v1381 = vpow.pop %v1380
        %v1382 = vmul.f32 %v1373, 1.442695
        %v1383 = vpow.pop %v1382
        %v1384 = vmul.f32 %v1374, 1.442695
        %v1385 = vpow.pop %v1384
        %v1386 = vmul.f32 %v1375, 1.442695
        %v1387 = vpow.pop %v1386
        %v1388 = vmul.f32 %v1376, 1.442695
        %v1389 = vpow.pop %v1388
        %v1390 = vmul.f32 %v1377, 1.442695
        %v1391 = vpow.pop %v1390
        %v1392 = vmul.f32 %v1378, 1.442695
        %v1393 = vpow.pop %v1392
        %v1394 = vmul.f32 %v1379, 1.442695
        %v1395 = vpow.pop %v1394
        %v1396 = vsub.f32 %v1381, 1.0
        %v1397 = vsub.f32 %v1383, 1.0
        %v1398 = vsub.f32 %v1385, 1.0
        %v1399 = vsub.f32 %v1387, 1.0
        %v1400 = vsub.f32 %v1389, 1.0
        %v1401 = vsub.f32 %v1391, 1.0
        %v1402 = vsub.f32 %v1393, 1.0
        %v1403 = vsub.f32 %v1395, 1.0
        %v1404 = vsel %vm1364, %v1356, %v1396
        %v1405 = vsel %vm1365, %v1357, %v1397
        %v1406 = vsel %vm1366, %v1358, %v1398
        %v1407 = vsel %vm1367, %v1359, %v1399
        %v1408 = vsel %vm1368, %v1360, %v1400
        %v1409 = vsel %vm1369, %v1361, %v1401
        %v1410 = vsel %vm1370, %v1362, %v1402
        %v1411 = vsel %vm1371, %v1363, %v1403
        %v1412 = vadd.f32 %v1404, %v1405
        %1413 = vadd.xlane.f32.xlu0 %v1412
        %v1414 = vpop.xlane.xlu0 %1413
        %v1415 = vadd.f32 %v1406, %v1407
        %1416 = vadd.xlane.f32.xlu0 %v1415
        %v1417 = vpop.xlane.xlu0 %1416
        %v1418 = vadd.f32 %v1408, %v1409
        %1419 = vadd.xlane.f32.xlu0 %v1418
        %v1420 = vpop.xlane.xlu0 %1419
        %v1421 = vadd.f32 %v1410, %v1411
        %1422 = vadd.xlane.f32.xlu0 %v1421
        %v1423 = vpop.xlane.xlu0 %1422
        %v1424 = vmul.f32 %v1404, %v1404
        %v1425 = vmul.f32 %v1405, %v1405
        %v1426 = vmul.f32 %v1406, %v1406
        %v1427 = vmul.f32 %v1407, %v1407
        %v1428 = vmul.f32 %v1408, %v1408
        %v1429 = vmul.f32 %v1409, %v1409
        %v1430 = vmul.f32 %v1410, %v1410
        %v1431 = vmul.f32 %v1411, %v1411
        %v1432 = vadd.f32 %v1424, %v1425
        %1433 = vadd.xlane.f32.xlu0 %v1432
        %v1434 = vpop.xlane.xlu0 %1433
        %v1435 = vadd.f32 %v1426, %v1427
        %1436 = vadd.xlane.f32.xlu0 %v1435
        %v1437 = vpop.xlane.xlu0 %1436
        %v1438 = vadd.f32 %v1428, %v1429
        %1439 = vadd.xlane.f32.xlu0 %v1438
        %v1440 = vpop.xlane.xlu0 %1439
        %v1441 = vadd.f32 %v1430, %v1431
        %1442 = vadd.xlane.f32.xlu0 %v1441
        %v1443 = vpop.xlane.xlu0 %1442
        %vm1444 = vcmask 7168
        %v1445 = vsel %vm1444, %v1414, %v1434
        %v1446 = vsel %vm1444, %v1417, %v1437
        %v1447 = vsel %vm1444, %v1420, %v1440
        %v1448 = vsel %vm1444, %v1423, %v1443
        %vm1449 = vcmask 261120
        %v1451 = vsel %vm1449, %v200, 0
        %v1454 = vsel %vm1449, %v201, 0
        %1456 = vmatprep.subr.mxu0 0.0
        %1457 = vmatpush1.msra.mxu0 %v1445
        %1458 = vmatprep.subr.mxu0 0.0
        %1459 = vmatpush1.msra.mxu0 %v1446
        %1460 = vmatprep.subr.mxu0 0.0
        %1461 = vmatpush1.msra.mxu0 %v1447
        %1462 = vmatprep.subr.mxu0 0.0
        %1463 = vmatpush1.msra.mxu0 %v1448
        %1464 = vmatprep.subr.mxu0 0.0
        %1465 = vmatpush1.msra.mxu0 0.0
        %1466 = vmatprep.subr.mxu0 0.0
        %1467 = vmatpush1.msra.mxu0 0.0
        %1468 = vmatprep.subr.mxu0 0.0
        %1469 = vmatpush1.msra.mxu0 0.0
        %1470 = vmatprep.subr.mxu0 0.0
        %1471 = vmatpush1.msra.mxu0 0.0
        %1472 = vmatprep.subr.mxu0 0.0
        %1473 = vmatpush1.msra.mxu0 0.0
        %1474 = vmatprep.subr.mxu0 0.0
        %1475 = vmatpush1.msra.mxu0 0.0
        %1476 = vmatprep.subr.mxu0 0.0
        %1477 = vmatpush1.msra.mxu0 0.0
        %1478 = vmatprep.subr.mxu0 0.0
        %1479 = vmatpush1.msra.mxu0 0.0
        %1480 = vmatprep.subr.mxu0 0.0
        %1481 = vmatpush1.msra.mxu0 0.0
        %1482 = vmatprep.subr.mxu0 0.0
        %1483 = vmatpush1.msra.mxu0 0.0
        %1484 = vmatprep.subr.mxu0 0.0
        %1485 = vmatpush1.msra.mxu0 0.0
        %1486 = vmatprep.subr.mxu0 0.0
        %1487 = vmatpush1.msra.mxu0 0.0
        %1488 = vmatprep.subr.mxu0 0.0
        %1489 = vmatpush1.msra.mxu0 0.0
        %1490 = vmatprep.subr.mxu0 0.0
        %1491 = vmatpush1.msra.mxu0 0.0
        %1492 = vmatprep.subr.mxu0 0.0
        %1493 = vmatpush1.msra.mxu0 0.0
        %1494 = vmatprep.subr.mxu0 0.0
        %1495 = vmatpush1.msra.mxu0 0.0
        %1496 = vmatprep.subr.mxu0 0.0
        %1497 = vmatpush1.msra.mxu0 0.0
        %1498 = vmatprep.subr.mxu0 0.0
        %1499 = vmatpush1.msra.mxu0 0.0
        %1500 = vmatprep.subr.mxu0 0.0
        %1501 = vmatpush1.msra.mxu0 0.0
        %1502 = vmatprep.subr.mxu0 0.0
        %1503 = vmatpush1.msra.mxu0 0.0
        %1504 = vmatprep.subr.mxu0 0.0
        %1505 = vmatpush1.msra.mxu0 0.0
        %1506 = vmatprep.subr.mxu0 0.0
        %1507 = vmatpush1.msra.mxu0 0.0
        %1508 = vmatprep.subr.mxu0 0.0
        %1509 = vmatpush1.msra.mxu0 0.0
        %1510 = vmatprep.subr.mxu0 0.0
        %1511 = vmatpush1.msra.mxu0 0.0
        %1512 = vmatprep.subr.mxu0 0.0
        %1513 = vmatpush1.msra.mxu0 0.0
        %1514 = vmatprep.subr.mxu0 0.0
        %1515 = vmatpush1.msra.mxu0 0.0
        %1516 = vmatprep.subr.mxu0 0.0
        %1517 = vmatpush1.msra.mxu0 0.0
        %1518 = vmatprep.subr.mxu0 0.0
        %1519 = vmatpush1.msra.mxu0 0.0
        %1520 = vmatprep.mubr.f32.mxu0 0.0
        %1521 = vmatmul.mubr.f32.gmra.mrb[0].mxu0 %v1451
        %v1522 = vpop.f32.mrb[0].mxu0
        %v1523 = vadd.f32 0.0, %v1522
        %v1524 = vpop.f32.mrb[0].mxu0
        %1525 = vmatprep.mubr.f32.mxu0 0.0
        %1526 = vmatmul.mubr.f32.gmra.mrb[0].mxu0 %v1454
        %v1527 = vpop.f32.mrb[0].mxu0
        %v1528 = vadd.f32 0.0, %v1527
        %v1529 = vpop.f32.mrb[0].mxu0
        %1530 = vdwg.mxu0
        %v1531 = vmul.f32 %v1523, 0.001953125
        %v1532 = vmul.f32 %v1528, 0.001953125
        %v1533 = vmul.f32 %v1531, %v1531
        %v1534 = vmul.f32 %v1532, %v1532
        %1537 = vrot.lane.b32.xlu0 %v1533, 1
        %v1538 = vpop.permute.xlu0 %1537
        %1539 = vrot.lane.b32.xlu0 %v1534, 1
        %v1540 = vpop.permute.xlu0 %1539
        %v1543 = vsub.f32 %v1531, %v1538
        %v1544 = vsub.f32 %v1532, %v1540
        %v1545 = vmax.f32 %v1543, 0.0
        %v1546 = vmax.f32 %v1544, 0.0
        %v1547 = vadd.f32 %v1545, 1e-05
        %v1548 = vadd.f32 %v1546, 1e-05
        %v1549 = vrsqrt.pop %v1547
        %v1550 = vrsqrt.pop %v1548
        %v1551 = vsel %vm1444, %v1531, %v1549
        %v1552 = vsel %vm1444, %v1532, %v1550
        %1557 = vrot.lane.b32.xlu0 %v196, 126
        %v1558 = vpop.permute.xlu0 %1557
        %1559 = vrot.lane.b32.xlu0 %v197, 126
        %v1560 = vpop.permute.xlu0 %1559
        %1561 = vrot.lane.b32.xlu0 %v198, 126
        %v1562 = vpop.permute.xlu0 %1561
        %1563 = vrot.lane.b32.xlu0 %v199, 126
        %v1564 = vpop.permute.xlu0 %1563
        %vm1565 = vcmask 130048
        %v1566 = vsel %vm1565, %v1558, 0
        %v1568 = vsel %vm1565, %v1560, 0
        %v1570 = vsel %vm1565, %v1562, 0
        %v1572 = vsel %vm1565, %v1564, 0
        %1574 = vmatprep.subr.mxu0 0.0
        %1575 = vmatpush1.msra.mxu0 %v1551
        %1576 = vmatprep.subr.mxu0 0.0
        %1577 = vmatpush1.msra.mxu0 %v1552
        %1578 = vmatprep.subr.mxu0 0.0
        %1579 = vmatpush1.msra.mxu0 0.0
        %1580 = vmatprep.subr.mxu0 0.0
        %1581 = vmatpush1.msra.mxu0 0.0
        %1582 = vmatprep.subr.mxu0 0.0
        %1583 = vmatpush1.msra.mxu0 0.0
        %1584 = vmatprep.subr.mxu0 0.0
        %1585 = vmatpush1.msra.mxu0 0.0
        %1586 = vmatprep.subr.mxu0 0.0
        %1587 = vmatpush1.msra.mxu0 0.0
        %1588 = vmatprep.subr.mxu0 0.0
        %1589 = vmatpush1.msra.mxu0 0.0
        %1590 = vmatprep.subr.mxu0 0.0
        %1591 = vmatpush1.msra.mxu0 0.0
        %1592 = vmatprep.subr.mxu0 0.0
        %1593 = vmatpush1.msra.mxu0 0.0
        %1594 = vmatprep.subr.mxu0 0.0
        %1595 = vmatpush1.msra.mxu0 0.0
        %1596 = vmatprep.subr.mxu0 0.0
        %1597 = vmatpush1.msra.mxu0 0.0
        %1598 = vmatprep.subr.mxu0 0.0
        %1599 = vmatpush1.msra.mxu0 0.0
        %1600 = vmatprep.subr.mxu0 0.0
        %1601 = vmatpush1.msra.mxu0 0.0
        %1602 = vmatprep.subr.mxu0 0.0
        %1603 = vmatpush1.msra.mxu0 0.0
        %1604 = vmatprep.subr.mxu0 0.0
        %1605 = vmatpush1.msra.mxu0 0.0
        %1606 = vmatprep.subr.mxu0 0.0
        %1607 = vmatpush1.msra.mxu0 0.0
        %1608 = vmatprep.subr.mxu0 0.0
        %1609 = vmatpush1.msra.mxu0 0.0
        %1610 = vmatprep.subr.mxu0 0.0
        %1611 = vmatpush1.msra.mxu0 0.0
        %1612 = vmatprep.subr.mxu0 0.0
        %1613 = vmatpush1.msra.mxu0 0.0
        %1614 = vmatprep.subr.mxu0 0.0
        %1615 = vmatpush1.msra.mxu0 0.0
        %1616 = vmatprep.subr.mxu0 0.0
        %1617 = vmatpush1.msra.mxu0 0.0
        %1618 = vmatprep.subr.mxu0 0.0
        %1619 = vmatpush1.msra.mxu0 0.0
        %1620 = vmatprep.subr.mxu0 0.0
        %1621 = vmatpush1.msra.mxu0 0.0
        %1622 = vmatprep.subr.mxu0 0.0
        %1623 = vmatpush1.msra.mxu0 0.0
        %1624 = vmatprep.subr.mxu0 0.0
        %1625 = vmatpush1.msra.mxu0 0.0
        %1626 = vmatprep.subr.mxu0 0.0
        %1627 = vmatpush1.msra.mxu0 0.0
        %1628 = vmatprep.subr.mxu0 0.0
        %1629 = vmatpush1.msra.mxu0 0.0
        %1630 = vmatprep.subr.mxu0 0.0
        %1631 = vmatpush1.msra.mxu0 0.0
        %1632 = vmatprep.subr.mxu0 0.0
        %1633 = vmatpush1.msra.mxu0 0.0
        %1634 = vmatprep.subr.mxu0 0.0
        %1635 = vmatpush1.msra.mxu0 0.0
        %1636 = vmatprep.subr.mxu0 0.0
        %1637 = vmatpush1.msra.mxu0 0.0
        %1638 = vmatprep.mubr.f32.mxu0 0.0
        %1639 = vmatmul.mubr.f32.gmra.mrb[0].mxu0 %v1566
        %v1640 = vpop.f32.mrb[0].mxu0
        %v1641 = vadd.f32 0.0, %v1640
        %v1642 = vpop.f32.mrb[0].mxu0
        %1643 = vmatprep.mubr.f32.mxu0 0.0
        %1644 = vmatmul.mubr.f32.gmra.mrb[0].mxu0 %v1568
        %v1645 = vpop.f32.mrb[0].mxu0
        %v1646 = vadd.f32 0.0, %v1645
        %v1647 = vpop.f32.mrb[0].mxu0
        %1648 = vmatprep.mubr.f32.mxu0 0.0
        %1649 = vmatmul.mubr.f32.gmra.mrb[0].mxu0 %v1570
        %v1650 = vpop.f32.mrb[0].mxu0
        %v1651 = vadd.f32 0.0, %v1650
        %v1652 = vpop.f32.mrb[0].mxu0
        %1653 = vmatprep.mubr.f32.mxu0 0.0
        %1654 = vmatmul.mubr.f32.gmra.mrb[0].mxu0 %v1572
        %v1655 = vpop.f32.mrb[0].mxu0
        %v1656 = vadd.f32 0.0, %v1655
        %v1657 = vpop.f32.mrb[0].mxu0
        %1658 = vdwg.mxu0
        %1659 = vrot.lane.b32.xlu0 %v196, 1
        %v1660 = vpop.permute.xlu0 %1659
        %1661 = vrot.lane.b32.xlu0 %v197, 1
        %v1662 = vpop.permute.xlu0 %1661
        %1663 = vrot.lane.b32.xlu0 %v198, 1
        %v1664 = vpop.permute.xlu0 %1663
        %1665 = vrot.lane.b32.xlu0 %v199, 1
        %v1666 = vpop.permute.xlu0 %1665
        %v1671 = vmul.f32 %v1641, %v1660
        %v1672 = vmul.f32 %v1646, %v1662
        %v1673 = vmul.f32 %v1651, %v1664
        %v1674 = vmul.f32 %v1656, %v1666
        %1679 = vrot.lane.b32.xlu0 %v1671, 127
        %v1680 = vpop.permute.xlu0 %1679
        %1681 = vrot.lane.b32.xlu0 %v1672, 127
        %v1682 = vpop.permute.xlu0 %1681
        %1683 = vrot.lane.b32.xlu0 %v1673, 127
        %v1684 = vpop.permute.xlu0 %1683
        %1685 = vrot.lane.b32.xlu0 %v1674, 127
        %v1686 = vpop.permute.xlu0 %1685
        %v1691 = vmul.f32 %v1641, %v1680
        %v1692 = vmul.f32 %v1646, %v1682
        %v1693 = vmul.f32 %v1651, %v1684
        %v1694 = vmul.f32 %v1656, %v1686
        %1699 = vrot.lane.b32.xlu0 %v1691, 1
        %v1700 = vpop.permute.xlu0 %1699
        %1701 = vrot.lane.b32.xlu0 %v1692, 1
        %v1702 = vpop.permute.xlu0 %1701
        %1703 = vrot.lane.b32.xlu0 %v1693, 1
        %v1704 = vpop.permute.xlu0 %1703
        %1705 = vrot.lane.b32.xlu0 %v1694, 1
        %v1706 = vpop.permute.xlu0 %1705
        %v1711 = vsub.f32 %v196, %v1700
        %v1712 = vsub.f32 %v197, %v1702
        %v1713 = vsub.f32 %v198, %v1704
        %v1714 = vsub.f32 %v199, %v1706
        %1715 = vset.pattern.permute.xlu0 1
        %1716 = vperm.xlu0 %1715, %v1671
        %v1717 = vpop.permute.xlu0 %1716
        %1719 = vset.pattern.permute.xlu0 1
        %1720 = vperm.xlu0 %1719, %v1672
        %v1721 = vpop.permute.xlu0 %1720
        %1723 = vset.pattern.permute.xlu0 1
        %1724 = vperm.xlu0 %1723, %v1673
        %v1725 = vpop.permute.xlu0 %1724
        %1727 = vset.pattern.permute.xlu0 1
        %1728 = vperm.xlu0 %1727, %v1674
        %v1729 = vpop.permute.xlu0 %1728
        %v1731 = vmul.f32 %v1404, %v1717
        %v1732 = vmul.f32 %v1405, %v1717
        %v1733 = vmul.f32 %v1406, %v1721
        %v1734 = vmul.f32 %v1407, %v1721
        %v1735 = vmul.f32 %v1408, %v1725
        %v1736 = vmul.f32 %v1409, %v1725
        %v1737 = vmul.f32 %v1410, %v1729
        %v1738 = vmul.f32 %v1411, %v1729
        %1740 = vset.pattern.permute.xlu0 1
        %1741 = vperm.xlu0 %1740, %v1711
        %v1742 = vpop.permute.xlu0 %1741
        %1745 = vset.pattern.permute.xlu0 1
        %1746 = vperm.xlu0 %1745, %v1712
        %v1747 = vpop.permute.xlu0 %1746
        %1750 = vset.pattern.permute.xlu0 1
        %1751 = vperm.xlu0 %1750, %v1713
        %v1752 = vpop.permute.xlu0 %1751
        %1755 = vset.pattern.permute.xlu0 1
        %1756 = vperm.xlu0 %1755, %v1714
        %v1757 = vpop.permute.xlu0 %1756
        %v1759 = vadd.f32 %v1731, %v1742
        %v1760 = vadd.f32 %v1732, %v1742
        %v1761 = vadd.f32 %v1733, %v1747
        %v1762 = vadd.f32 %v1734, %v1747
        %v1763 = vadd.f32 %v1735, %v1752
        %v1764 = vadd.f32 %v1736, %v1752
        %v1765 = vadd.f32 %v1737, %v1757
        %v1766 = vadd.f32 %v1738, %v1757
        %1767 = vst [vmem:[%s190] sm:$0xff] %v1759
        %1768 = vst [vmem:[%s190 + $0x8] sm:$0xff] %v1760
        %1769 = vst [vmem:[%s190 + $0x10] sm:$0xff] %v1761
        %1770 = vst [vmem:[%s190 + $0x18] sm:$0xff] %v1762
        %1771 = vst [vmem:[%s190 + $0x20] sm:$0xff] %v1763
        %1772 = vst [vmem:[%s190 + $0x28] sm:$0xff] %v1764
        %1773 = vst [vmem:[%s190 + $0x30] sm:$0xff] %v1765
        %1774 = vst [vmem:[%s190 + $0x38] sm:$0xff] %v1766
        %s1775 = sand.u32 %s115, 1
        %s1776 = scalar_lea.sflag [#allocation3], %s1775
        %s1777 = sand.u32 %s115, 1
        %s1778 = smul.addr %s1777, 64
        %s1779 = scalar_lea.vmem [#allocation2], %s1778
        // Predicated region
        $region37: #{tpu_custom_call.1} parent=35 // pred_check
          %p1780 = pneg %p125
        $region38: #{tpu_custom_call.1} parent=35 // pred_check_branch
          %1782 = sbr.rel (%p1780) target = $region40
        $region39: #{tpu_custom_call.1} parent=35 // pred_region
          %s1784 = ssub.s32 1024, 1024
          %1785 = vsyncadd %s1776, %s1784
          %s1786 = smul.addr %s18, 8
          %s1787 = smul.addr %s1786, 128
          %s1788 = scalar_lea.hbm %s4, %s1787
          %s1789 = sshll.u32 %s1779, 4
          %s1790 = int_to_ptr.vmem [resolvable:$true] %s1789
          %1795 = dma.vmem_to_hbm [thread:$0]  %s1790, 1024, %s1788, %s1776, 256, 256, 16
        $region40: #{tpu_custom_call.1} parent=35 // pred_fallthru
          _
      $region36: #{tpu_custom_call.1} parent=5 // pred_fallthru
        _
      %p1796 = scmp.le.s32.totalorder 2, %s13
      // Predicated region
      $region41: #{tpu_custom_call.1} parent=5 // pred_check
        %p1797 = pneg %p1796
      $region42: #{tpu_custom_call.1} parent=5 // pred_check_branch
        %1799 = sbr.rel (%p1797) target = $region44
      $region43: #{tpu_custom_call.1} parent=5 // pred_region
        %s1800 = ssub.s32 %s13, 2
        // Predicated region
        $region45: #{tpu_custom_call.1} parent=43 // pred_check
          %p1801 = pneg %p131
        $region46: #{tpu_custom_call.1} parent=43 // pred_check_branch
          %1803 = sbr.rel (%p1801) target = $region48
        $region47: #{tpu_custom_call.1} parent=43 // pred_region
          %s1804 = sand.u32 %s116, 1
          %s1805 = scalar_lea.sflag [#allocation3], %s1804
          %s1806 = sand.u32 %s116, 1
          %s1807 = smul.addr %s1806, 64
          %s1808 = scalar_lea.vmem [#allocation2], %s1807
          %1809 = dma.done %s1805, 1024
        $region48: #{tpu_custom_call.1} parent=43 // pred_fallthru
          _
      $region44: #{tpu_custom_call.1} parent=5 // pred_fallthru
        _
    $region6: #{tpu_custom_call.1} parent=1 // loop_footer
      %s17 = sadd.s32 1, %s13
    $region7: #{tpu_custom_call.1} parent=1 // loop_footer_branch
      %12 = sbr.rel target = $region3
    $region8: #{tpu_custom_call.1} parent=1 // loop_exit
      _
    %1810 = vsyncpa [#allocation3], 1
    %s1811 = scalar_lea.sflag [#allocation3], 1
    %1812 = vsyncpa %s1811, 1

</llo_original>
